<compile_context>
chip_gen: v5e
topology: v5e:2x2
jax: 0.10.0
libtpu: 0.0.40
codegen_flags: <defaults>
</compile_context>

<pallas_src>
import functools

import jax
import jax.numpy as jnp
from jax.experimental import pallas as pl
from jax.experimental.pallas import tpu as pltpu

_BN_EPS = 1e-5
_LANE = 128


# --------------------------- sizing helpers ---------------------------------
def _vmem_budget_bytes():
    """Generation-aware VMEM budget (v5e/v6e: 128 MiB physical, v7x: 64 MiB)."""
    try:
        cap = int(pltpu.get_tpu_info().vmem_capacity_bytes)
    except Exception:
        cap = 64 * 1024 * 1024
    return max(32 * 1024 * 1024, min(cap * 3 // 4, 96 * 1024 * 1024))


def _pick_tl(length, tile_l, c_in, c_out, has_proj, budget):
    """Largest L-tile (multiple of 128 that divides L) whose working set fits."""
    cands = [d for d in range(_LANE, length + 1, _LANE) if length % d == 0]
    if not cands:
        # TODO(synk): L not a multiple of 128 falls back to a single lane block;
        # pad/mask L inside the kernel if such shapes appear at large L.
        return length

    def est(t):
        # 2x double-buffered x and out tiles + ~3 live f32 (C_out, t) temps.
        act = (2 * c_in + 5 * c_out) * t * 4
        # Grid-invariant bf16 weights are still double-buffered by the pipeline.
        wts = 2 * (c_out * c_in + c_out * c_out
                   + (c_out * c_in if has_proj else 0)) * 2
        return act + wts

    fitting = [d for d in cands if d <= max(tile_l, _LANE) and est(d) <= budget]
    return max(fitting) if fitting else cands[0]


# --------------------------- in-kernel helpers -------------------------------
def _accum_stats(z, sum_ref, sq_ref):
    # z: (C_out, TL) f32; per-channel lane reductions into resident accumulators.
    sum_ref[...] += jnp.sum(z, axis=-1, keepdims=True)
    sq_ref[...] += jnp.sum(z * z, axis=-1, keepdims=True)


# ---------------- pass 1: stats of conv1(x) (and shortcut conv(x)) ----------
def _stats1_proj_kernel(x_ref, w1_ref, ws_ref, s1s_ref, s1q_ref, sss_ref,
                        ssq_ref):
    @pl.when(pl.program_id(1) == 0)
    def _():
        s1s_ref[...] = jnp.zeros_like(s1s_ref)
        s1q_ref[...] = jnp.zeros_like(s1q_ref)
        sss_ref[...] = jnp.zeros_like(sss_ref)
        ssq_ref[...] = jnp.zeros_like(ssq_ref)

    xb = x_ref[...].astype(w1_ref.dtype)                      # (C_in, TL) bf16
    z1 = jnp.dot(w1_ref[...], xb, preferred_element_type=jnp.float32)
    zs = jnp.dot(ws_ref[...], xb, preferred_element_type=jnp.float32)
    _accum_stats(z1, s1s_ref, s1q_ref)
    _accum_stats(zs, sss_ref, ssq_ref)


def _stats1_id_kernel(x_ref, w1_ref, s1s_ref, s1q_ref):
    @pl.when(pl.program_id(1) == 0)
    def _():
        s1s_ref[...] = jnp.zeros_like(s1s_ref)
        s1q_ref[...] = jnp.zeros_like(s1q_ref)

    xb = x_ref[...].astype(w1_ref.dtype)
    z1 = jnp.dot(w1_ref[...], xb, preferred_element_type=jnp.float32)
    _accum_stats(z1, s1s_ref, s1q_ref)


# ---------------- pass 2: stats of conv2(relu(bn1(conv1(x)))) ---------------
def _stats2_kernel(x_ref, w1_ref, a1_ref, c1_ref, w2_ref, s2s_ref, s2q_ref):
    @pl.when(pl.program_id(1) == 0)
    def _():
        s2s_ref[...] = jnp.zeros_like(s2s_ref)
        s2q_ref[...] = jnp.zeros_like(s2q_ref)

    xb = x_ref[...].astype(w1_ref.dtype)
    z1 = jnp.dot(w1_ref[...], xb, preferred_element_type=jnp.float32)
    h1 = jnp.maximum(z1 * a1_ref[...] + c1_ref[...], 0.0)     # BN1 folded FMA
    z2 = jnp.dot(w2_ref[...], h1.astype(w2_ref.dtype),
                 preferred_element_type=jnp.float32)
    _accum_stats(z2, s2s_ref, s2q_ref)


# ---------------- pass 3: normalize + shortcut + final ReLU -----------------
def _final_proj_kernel(x_ref, w1_ref, a1_ref, c1_ref, w2_ref, a2_ref, c2_ref,
                       ws_ref, as_ref, cs_ref, o_ref):
    xb = x_ref[...].astype(w1_ref.dtype)
    # Shortcut first so its x-dependent values can die early (live ranges).
    sc = (jnp.dot(ws_ref[...], xb, preferred_element_type=jnp.float32)
          * as_ref[...] + cs_ref[...])
    z1 = jnp.dot(w1_ref[...], xb, preferred_element_type=jnp.float32)
    h1 = jnp.maximum(z1 * a1_ref[...] + c1_ref[...], 0.0)
    z2 = jnp.dot(w2_ref[...], h1.astype(w2_ref.dtype),
                 preferred_element_type=jnp.float32)
    o_ref[...] = jnp.maximum(z2 * a2_ref[...] + c2_ref[...] + sc,
                             0.0).astype(o_ref.dtype)


def _final_id_kernel(x_ref, w1_ref, a1_ref, c1_ref, w2_ref, a2_ref, c2_ref,
                     o_ref):
    x = x_ref[...]                                            # f32 residual
    xb = x.astype(w1_ref.dtype)
    z1 = jnp.dot(w1_ref[...], xb, preferred_element_type=jnp.float32)
    h1 = jnp.maximum(z1 * a1_ref[...] + c1_ref[...], 0.0)
    z2 = jnp.dot(w2_ref[...], h1.astype(w2_ref.dtype),
                 preferred_element_type=jnp.float32)
    o_ref[...] = jnp.maximum(z2 * a2_ref[...] + c2_ref[...]
                             + x.astype(jnp.float32), 0.0).astype(o_ref.dtype)


def _bn_fold(s_sum, s_sq, gamma, beta, m):
    """Per-batch partials (N, C, 1) -> folded BN (scale, shift), each (C, 1).

    Combining the per-core/per-batch partials is exact in f32; the final
    var = E[z^2] - E[z]^2 is guarded with max(., 0).
    """
    tot = jnp.sum(s_sum, axis=0, dtype=jnp.float32)           # (C_out, 1)
    tot2 = jnp.sum(s_sq, axis=0, dtype=jnp.float32)
    mean = tot / m
    var = jnp.maximum(tot2 / m - mean * mean, 0.0)
    scale = gamma * jax.lax.rsqrt(var + _BN_EPS)
    shift = beta - mean * scale
    return scale, shift


# --------------------------------- wrapper ----------------------------------
@functools.partial(jax.jit, static_argnames=("tile_l",))
def residual_block_forward(x_ncl, params, *, tile_l=2048):
    """Forward pass of the PointResNet ResidualBlock.

    x_ncl:  (N, C_in, L) float32, PyTorch NCL layout (consumed natively).
    params: dict of f32 arrays (conv weights stored (C_out, C_in), PyTorch
        Conv1d weight with the kernel dim squeezed):
        w1, g1, be1, w2, g2, be2 and, when C_in != C_out, ws, gs, bes.
        Conv biases (b1, b2, bs) may be present but are unused: training-mode
        BatchNorm's mean subtraction cancels them exactly.
    """
    n, c_in, length = x_ncl.shape
    c_out = params["w1"].shape[0]
    has_proj = "ws" in params
    m = float(n * length)

    budget = _vmem_budget_bytes()
    tl = _pick_tl(length, tile_l, c_in, c_out, has_proj, budget)
    grid = (n, length // tl)

    cdt = jnp.bfloat16  # MXU operand dtype (f32 accumulation on the MXU)
    w1 = params["w1"].astype(cdt)                             # (C_out, C_in)
    w2 = params["w2"].astype(cdt)                             # (C_out, C_out)
    g1 = params["g1"].reshape(c_out, 1).astype(jnp.float32)
    be1 = params["be1"].reshape(c_out, 1).astype(jnp.float32)
    g2 = params["g2"].reshape(c_out, 1).astype(jnp.float32)
    be2 = params["be2"].reshape(c_out, 1).astype(jnp.float32)

    x_spec = pl.BlockSpec((None, c_in, tl), lambda nb, lb: (nb, 0, lb))
    w_in_spec = pl.BlockSpec((c_out, c_in), lambda nb, lb: (0, 0))
    w_out_spec = pl.BlockSpec((c_out, c_out), lambda nb, lb: (0, 0))
    vec_spec = pl.BlockSpec((c_out, 1), lambda nb, lb: (0, 0))
    stat_spec = pl.BlockSpec((None, c_out, 1), lambda nb, lb: (nb, 0, 0))
    stat_shape = jax.ShapeDtypeStruct((n, c_out, 1), jnp.float32)

    stats_params = pltpu.CompilerParams(
        dimension_semantics=("parallel", "arbitrary"),   # resident per-n stats
        vmem_limit_bytes=budget)
    par_params = pltpu.CompilerParams(
        dimension_semantics=("parallel", "parallel"),    # megacore on v7x
        vmem_limit_bytes=budget)

    # ---- pass 1: BN1 (and shortcut BN) statistics ---------------------------
    if has_proj:
        ws = params["ws"].astype(cdt)
        gs = params["gs"].reshape(c_out, 1).astype(jnp.float32)
        bes = params["bes"].reshape(c_out, 1).astype(jnp.float32)
        s1s, s1q, sss, ssq = pl.pallas_call(
            _stats1_proj_kernel,
            out_shape=(stat_shape,) * 4,
            grid=grid,
            in_specs=[x_spec, w_in_spec, w_in_spec],
            out_specs=(stat_spec,) * 4,
            compiler_params=stats_params,
        )(x_ncl, w1, ws)
        a_s, c_s = _bn_fold(sss, ssq, gs, bes, m)
    else:
        s1s, s1q = pl.pallas_call(
            _stats1_id_kernel,
            out_shape=(stat_shape,) * 2,
            grid=grid,
            in_specs=[x_spec, w_in_spec],
            out_specs=(stat_spec,) * 2,
            compiler_params=stats_params,
        )(x_ncl, w1)
    a1, c1 = _bn_fold(s1s, s1q, g1, be1, m)

    # ---- pass 2: BN2 statistics ---------------------------------------------
    s2s, s2q = pl.pallas_call(
        _stats2_kernel,
        out_shape=(stat_shape,) * 2,
        grid=grid,
        in_specs=[x_spec, w_in_spec, vec_spec, vec_spec, w_out_spec],
        out_specs=(stat_spec,) * 2,
        compiler_params=stats_params,
    )(x_ncl, w1, a1, c1, w2)
    a2, c2 = _bn_fold(s2s, s2q, g2, be2, m)

    # ---- pass 3: normalize + residual + final ReLU (native NCL output) ------
    out_spec = pl.BlockSpec((None, c_out, tl), lambda nb, lb: (nb, 0, lb))
    out_shape = jax.ShapeDtypeStruct((n, c_out, length), x_ncl.dtype)
    if has_proj:
        y = pl.pallas_call(
            _final_proj_kernel,
            out_shape=out_shape,
            grid=grid,
            in_specs=[x_spec, w_in_spec, vec_spec, vec_spec, w_out_spec,
                      vec_spec, vec_spec, w_in_spec, vec_spec, vec_spec],
            out_specs=out_spec,
            compiler_params=par_params,
        )(x_ncl, w1, a1, c1, w2, a2, c2, ws, a_s, c_s)
    else:
        y = pl.pallas_call(
            _final_id_kernel,
            out_shape=out_shape,
            grid=grid,
            in_specs=[x_spec, w_in_spec, vec_spec, vec_spec, w_out_spec,
                      vec_spec, vec_spec],
            out_specs=out_spec,
            compiler_params=par_params,
        )(x_ncl, w1, a1, c1, w2, a2, c2)
    return y


# ------------------------------ test scaffolding -----------------------------
def init_params(key, in_channels, out_channels):
    """Deterministic synthetic parameters matching the PyTorch module shapes.

    Conv1d weights stored as (C_out, C_in); conv biases are generated for the
    reference (the kernel omits them — exactly cancelled by training-mode BN);
    BN gamma/beta as (C_out,) vectors.
    """
    ks = jax.random.split(key, 6)

    def conv(k, ci, co):
        w = jax.random.normal(k, (co, ci), jnp.float32) / jnp.sqrt(float(ci))
        b = jnp.linspace(-0.1, 0.1, co, dtype=jnp.float32)
        return w, b

    def bn(k, co):
        g = 1.0 + 0.1 * jax.random.normal(k, (co,), jnp.float32)
        be = 0.02 * jnp.arange(co, dtype=jnp.float32)
        return g, be

    w1, b1 = conv(ks[0], in_channels, out_channels)
    g1, be1 = bn(ks[1], out_channels)
    w2, b2 = conv(ks[2], out_channels, out_channels)
    g2, be2 = bn(ks[3], out_channels)
    p = dict(w1=w1, b1=b1, g1=g1, be1=be1, w2=w2, b2=b2, g2=g2, be2=be2)
    if in_channels != out_channels:
        ws, bs = conv(ks[4], in_channels, out_channels)
        gs, bes = bn(ks[5], out_channels)
        p.update(ws=ws, bs=bs, gs=gs, bes=bes)
    return p


def _reference_forward(x_ncl, params):
    """Pure-JAX f32 reference of the PyTorch forward (training-mode BN, with
    conv biases, two-pass variance), used only for verification."""
    n, c_in, length = x_ncl.shape
    c_out = params["w1"].shape[0]
    x = jnp.transpose(x_ncl, (0, 2, 1)).reshape(n * length, c_in)

    def bn(h, g, be):
        mu = h.mean(0, keepdims=True)
        var = ((h - mu) ** 2).mean(0, keepdims=True)
        return (h - mu) / jnp.sqrt(var + _BN_EPS) * g + be

    h = jnp.maximum(
        bn(x @ params["w1"].T + params["b1"], params["g1"], params["be1"]), 0.0)
    h = bn(h @ params["w2"].T + params["b2"], params["g2"], params["be2"])
    if "ws" in params:
        sc = bn(x @ params["ws"].T + params["bs"], params["gs"], params["bes"])
    else:
        sc = x
    out = jnp.maximum(h + sc, 0.0)
    return jnp.transpose(out.reshape(n, length, c_out), (0, 2, 1))


if __name__ == "__main__":
    key = jax.random.PRNGKey(0)
    kx, kp, kx2, kp2, kx3, kp3 = jax.random.split(key, 6)

    # Projection-shortcut case (C_in != C_out), small shapes.
    N, C_IN, C_OUT, L = 2, 4, 8, 16
    x = jax.random.normal(kx, (N, C_IN, L), jnp.float32)
    params = init_params(kp, C_IN, C_OUT)
    out = jax.block_until_ready(residual_block_forward(x, params))
    assert out.shape == (N, C_OUT, L)
    ref = _reference_forward(x, params)
    assert jnp.allclose(out, ref, atol=5e-2, rtol=5e-2), \
        "projection path mismatch vs JAX reference"

    # Identity-shortcut case (C_in == C_out).
    x2 = jax.random.normal(kx2, (N, C_OUT, L), jnp.float32)
    params2 = init_params(kp2, C_OUT, C_OUT)
    out2 = jax.block_until_ready(residual_block_forward(x2, params2))
    assert out2.shape == (N, C_OUT, L)
    ref2 = _reference_forward(x2, params2)
    assert jnp.allclose(out2, ref2, atol=5e-2, rtol=5e-2), \
        "identity path mismatch vs JAX reference"

    # Lane-tiled case (L a multiple of 128, multiple L blocks per batch).
    N3, C_IN3, C_OUT3, L3 = 2, 32, 64, 256
    x3 = jax.random.normal(kx3, (N3, C_IN3, L3), jnp.float32)
    params3 = init_params(kp3, C_IN3, C_OUT3)
    out3 = jax.block_until_ready(
        residual_block_forward(x3, params3, tile_l=128))
    assert out3.shape == (N3, C_OUT3, L3)
    ref3 = _reference_forward(x3, params3)
    assert jnp.allclose(out3, ref3, atol=5e-2, rtol=5e-2), \
        "tiled path mismatch vs JAX reference"

    print("KERNEL_OK")
</pallas_src>

<mosaic_0001>
module attributes {stable_mosaic.version = 11 : i64} {
  func.func @_stats1_proj_kernel(%arg0: i32, %arg1: i32, %arg2: memref<1x4x16xf32, #tpu.memory_space<vmem>>, %arg3: memref<8x4xbf16, #tpu.memory_space<vmem>>, %arg4: memref<8x4xbf16, #tpu.memory_space<vmem>>, %arg5: memref<1x8x1xf32, #tpu.memory_space<vmem>>, %arg6: memref<1x8x1xf32, #tpu.memory_space<vmem>>, %arg7: memref<1x8x1xf32, #tpu.memory_space<vmem>>, %arg8: memref<1x8x1xf32, #tpu.memory_space<vmem>>) attributes {dimension_semantics = [#tpu.dimension_semantics<parallel>, #tpu.dimension_semantics<arbitrary>], iteration_bounds = array<i64: 2, 1>, scalar_prefetch = 0 : i64, scratch_operands = 0 : i64, tpu.core_type = #tpu.core_type<tc>, window_params = [{transform_indices = @transform_0, window_bounds = array<i64: 1, 4, 16>}, {pipeline_mode = #tpu.pipeline_mode<synchronous>, transform_indices = @transform_1, window_bounds = array<i64: 8, 4>}, {pipeline_mode = #tpu.pipeline_mode<synchronous>, transform_indices = @transform_2, window_bounds = array<i64: 8, 4>}, {transform_indices = @transform_3, window_bounds = array<i64: 1, 8, 1>}, {transform_indices = @transform_4, window_bounds = array<i64: 1, 8, 1>}, {transform_indices = @transform_5, window_bounds = array<i64: 1, 8, 1>}, {transform_indices = @transform_6, window_bounds = array<i64: 1, 8, 1>}]} {
    %c0_i32 = arith.constant 0 : i32
    %0 = arith.cmpi eq, %arg1, %c0_i32 : i32
    %1 = arith.extui %0 : i1 to i32
    %c0_i32_0 = arith.constant 0 : i32
    %2 = arith.cmpi ne, %1, %c0_i32_0 : i32
    scf.if %2 {
      %cst_36 = arith.constant 0.000000e+00 : f32
      %44 = vector.broadcast %cst_36 : f32 to vector<8x1xf32>
      %c0_37 = arith.constant 0 : index
      %c0_38 = arith.constant 0 : index
      %c0_39 = arith.constant 0 : index
      %45 = vector.load %arg5[%c0_37, %c0_38, %c0_39] : memref<1x8x1xf32, #tpu.memory_space<vmem>>, vector<1x8x1xf32>
      %46 = vector.shape_cast %45 : vector<1x8x1xf32> to vector<8x1xf32>
      %47 = vector.shape_cast %44 : vector<8x1xf32> to vector<1x8x1xf32>
      tpu.vector_store %arg5[%c0_37, %c0_38, %c0_39], %47 {strides = array<i32>} : memref<1x8x1xf32, #tpu.memory_space<vmem>>, vector<1x8x1xf32>,
      %cst_40 = arith.constant 0.000000e+00 : f32
      %48 = vector.broadcast %cst_40 : f32 to vector<8x1xf32>
      %c0_41 = arith.constant 0 : index
      %c0_42 = arith.constant 0 : index
      %c0_43 = arith.constant 0 : index
      %49 = vector.load %arg6[%c0_41, %c0_42, %c0_43] : memref<1x8x1xf32, #tpu.memory_space<vmem>>, vector<1x8x1xf32>
      %50 = vector.shape_cast %49 : vector<1x8x1xf32> to vector<8x1xf32>
      %51 = vector.shape_cast %48 : vector<8x1xf32> to vector<1x8x1xf32>
      tpu.vector_store %arg6[%c0_41, %c0_42, %c0_43], %51 {strides = array<i32>} : memref<1x8x1xf32, #tpu.memory_space<vmem>>, vector<1x8x1xf32>,
      %cst_44 = arith.constant 0.000000e+00 : f32
      %52 = vector.broadcast %cst_44 : f32 to vector<8x1xf32>
      %c0_45 = arith.constant 0 : index
      %c0_46 = arith.constant 0 : index
      %c0_47 = arith.constant 0 : index
      %53 = vector.load %arg7[%c0_45, %c0_46, %c0_47] : memref<1x8x1xf32, #tpu.memory_space<vmem>>, vector<1x8x1xf32>
      %54 = vector.shape_cast %53 : vector<1x8x1xf32> to vector<8x1xf32>
      %55 = vector.shape_cast %52 : vector<8x1xf32> to vector<1x8x1xf32>
      tpu.vector_store %arg7[%c0_45, %c0_46, %c0_47], %55 {strides = array<i32>} : memref<1x8x1xf32, #tpu.memory_space<vmem>>, vector<1x8x1xf32>,
      %cst_48 = arith.constant 0.000000e+00 : f32
      %56 = vector.broadcast %cst_48 : f32 to vector<8x1xf32>
      %c0_49 = arith.constant 0 : index
      %c0_50 = arith.constant 0 : index
      %c0_51 = arith.constant 0 : index
      %57 = vector.load %arg8[%c0_49, %c0_50, %c0_51] : memref<1x8x1xf32, #tpu.memory_space<vmem>>, vector<1x8x1xf32>
      %58 = vector.shape_cast %57 : vector<1x8x1xf32> to vector<8x1xf32>
      %59 = vector.shape_cast %56 : vector<8x1xf32> to vector<1x8x1xf32>
      tpu.vector_store %arg8[%c0_49, %c0_50, %c0_51], %59 {strides = array<i32>} : memref<1x8x1xf32, #tpu.memory_space<vmem>>, vector<1x8x1xf32>,
    } else {
    }
    %c0 = arith.constant 0 : index
    %c0_1 = arith.constant 0 : index
    %c0_2 = arith.constant 0 : index
    %3 = vector.load %arg2[%c0, %c0_1, %c0_2] : memref<1x4x16xf32, #tpu.memory_space<vmem>>, vector<1x4x16xf32>
    %4 = vector.shape_cast %3 : vector<1x4x16xf32> to vector<4x16xf32>
    %5 = arith.truncf %4 : vector<4x16xf32> to vector<4x16xbf16>
    %c0_3 = arith.constant 0 : index
    %c0_4 = arith.constant 0 : index
    %6 = vector.load %arg3[%c0_3, %c0_4] : memref<8x4xbf16, #tpu.memory_space<vmem>>, vector<8x4xbf16>
    %cst = arith.constant dense<0.000000e+00> : vector<8x16xf32>
    %7 = tpu.matmul %6, %5, %cst {dimension_numbers = #tpu.dot_dimension_numbers<[1], [0], [0], [1], [0, 0, 1, 1], [], []>} : vector<8x4xbf16>, vector<4x16xbf16>, vector<8x16xf32> -> vector<8x16xf32>
    %c0_5 = arith.constant 0 : index
    %c0_6 = arith.constant 0 : index
    %8 = vector.load %arg4[%c0_5, %c0_6] : memref<8x4xbf16, #tpu.memory_space<vmem>>, vector<8x4xbf16>
    %cst_7 = arith.constant dense<0.000000e+00> : vector<8x16xf32>
    %9 = tpu.matmul %8, %5, %cst_7 {dimension_numbers = #tpu.dot_dimension_numbers<[1], [0], [0], [1], [0, 0, 1, 1], [], []>} : vector<8x4xbf16>, vector<4x16xbf16>, vector<8x16xf32> -> vector<8x16xf32>
    %c0_8 = arith.constant 0 : index
    %c0_9 = arith.constant 0 : index
    %c0_10 = arith.constant 0 : index
    %10 = vector.load %arg5[%c0_8, %c0_9, %c0_10] : memref<1x8x1xf32, #tpu.memory_space<vmem>>, vector<1x8x1xf32>
    %11 = vector.shape_cast %10 : vector<1x8x1xf32> to vector<8x1xf32>
    %cst_11 = arith.constant dense<0.000000e+00> : vector<8xf32>
    %12 = vector.multi_reduction <add>, %7, %cst_11 [1] : vector<8x16xf32> to vector<8xf32>
    %13 = vector.shape_cast %12 : vector<8xf32> to vector<8x1xf32>
    %14 = arith.addf %11, %13 : vector<8x1xf32>
    %c0_12 = arith.constant 0 : index
    %c0_13 = arith.constant 0 : index
    %c0_14 = arith.constant 0 : index
    %15 = vector.load %arg5[%c0_12, %c0_13, %c0_14] : memref<1x8x1xf32, #tpu.memory_space<vmem>>, vector<1x8x1xf32>
    %16 = vector.shape_cast %15 : vector<1x8x1xf32> to vector<8x1xf32>
    %17 = vector.shape_cast %14 : vector<8x1xf32> to vector<1x8x1xf32>
    tpu.vector_store %arg5[%c0_12, %c0_13, %c0_14], %17 {strides = array<i32>} : memref<1x8x1xf32, #tpu.memory_space<vmem>>, vector<1x8x1xf32>,
    %c0_15 = arith.constant 0 : index
    %c0_16 = arith.constant 0 : index
    %c0_17 = arith.constant 0 : index
    %18 = vector.load %arg6[%c0_15, %c0_16, %c0_17] : memref<1x8x1xf32, #tpu.memory_space<vmem>>, vector<1x8x1xf32>
    %19 = vector.shape_cast %18 : vector<1x8x1xf32> to vector<8x1xf32>
    %20 = arith.mulf %7, %7 : vector<8x16xf32>
    %cst_18 = arith.constant dense<0.000000e+00> : vector<8xf32>
    %21 = vector.multi_reduction <add>, %20, %cst_18 [1] : vector<8x16xf32> to vector<8xf32>
    %22 = vector.shape_cast %21 : vector<8xf32> to vector<8x1xf32>
    %23 = arith.addf %19, %22 : vector<8x1xf32>
    %c0_19 = arith.constant 0 : index
    %c0_20 = arith.constant 0 : index
    %c0_21 = arith.constant 0 : index
    %24 = vector.load %arg6[%c0_19, %c0_20, %c0_21] : memref<1x8x1xf32, #tpu.memory_space<vmem>>, vector<1x8x1xf32>
    %25 = vector.shape_cast %24 : vector<1x8x1xf32> to vector<8x1xf32>
    %26 = vector.shape_cast %23 : vector<8x1xf32> to vector<1x8x1xf32>
    tpu.vector_store %arg6[%c0_19, %c0_20, %c0_21], %26 {strides = array<i32>} : memref<1x8x1xf32, #tpu.memory_space<vmem>>, vector<1x8x1xf32>,
    %c0_22 = arith.constant 0 : index
    %c0_23 = arith.constant 0 : index
    %c0_24 = arith.constant 0 : index
    %27 = vector.load %arg7[%c0_22, %c0_23, %c0_24] : memref<1x8x1xf32, #tpu.memory_space<vmem>>, vector<1x8x1xf32>
    %28 = vector.shape_cast %27 : vector<1x8x1xf32> to vector<8x1xf32>
    %cst_25 = arith.constant dense<0.000000e+00> : vector<8xf32>
    %29 = vector.multi_reduction <add>, %9, %cst_25 [1] : vector<8x16xf32> to vector<8xf32>
    %30 = vector.shape_cast %29 : vector<8xf32> to vector<8x1xf32>
    %31 = arith.addf %28, %30 : vector<8x1xf32>
    %c0_26 = arith.constant 0 : index
    %c0_27 = arith.constant 0 : index
    %c0_28 = arith.constant 0 : index
    %32 = vector.load %arg7[%c0_26, %c0_27, %c0_28] : memref<1x8x1xf32, #tpu.memory_space<vmem>>, vector<1x8x1xf32>
    %33 = vector.shape_cast %32 : vector<1x8x1xf32> to vector<8x1xf32>
    %34 = vector.shape_cast %31 : vector<8x1xf32> to vector<1x8x1xf32>
    tpu.vector_store %arg7[%c0_26, %c0_27, %c0_28], %34 {strides = array<i32>} : memref<1x8x1xf32, #tpu.memory_space<vmem>>, vector<1x8x1xf32>,
    %c0_29 = arith.constant 0 : index
    %c0_30 = arith.constant 0 : index
    %c0_31 = arith.constant 0 : index
    %35 = vector.load %arg8[%c0_29, %c0_30, %c0_31] : memref<1x8x1xf32, #tpu.memory_space<vmem>>, vector<1x8x1xf32>
    %36 = vector.shape_cast %35 : vector<1x8x1xf32> to vector<8x1xf32>
    %37 = arith.mulf %9, %9 : vector<8x16xf32>
    %cst_32 = arith.constant dense<0.000000e+00> : vector<8xf32>
    %38 = vector.multi_reduction <add>, %37, %cst_32 [1] : vector<8x16xf32> to vector<8xf32>
    %39 = vector.shape_cast %38 : vector<8xf32> to vector<8x1xf32>
    %40 = arith.addf %36, %39 : vector<8x1xf32>
    %c0_33 = arith.constant 0 : index
    %c0_34 = arith.constant 0 : index
    %c0_35 = arith.constant 0 : index
    %41 = vector.load %arg8[%c0_33, %c0_34, %c0_35] : memref<1x8x1xf32, #tpu.memory_space<vmem>>, vector<1x8x1xf32>
    %42 = vector.shape_cast %41 : vector<1x8x1xf32> to vector<8x1xf32>
    %43 = vector.shape_cast %40 : vector<8x1xf32> to vector<1x8x1xf32>
    tpu.vector_store %arg8[%c0_33, %c0_34, %c0_35], %43 {strides = array<i32>} : memref<1x8x1xf32, #tpu.memory_space<vmem>>, vector<1x8x1xf32>,
    return
  }
  func.func @transform_0(%arg0: i32, %arg1: i32) -> (i32, i32, i32) {
    %c0_i32 = arith.constant 0 : i32
    %c0_i32_0 = arith.constant 0 : i32
    return %arg0, %c0_i32, %arg1 : i32, i32, i32
  }
  func.func @transform_1(%arg0: i32, %arg1: i32) -> (i32, i32) {
    %c0_i32 = arith.constant 0 : i32
    %c0_i32_0 = arith.constant 0 : i32
    %c0_i32_1 = arith.constant 0 : i32
    return %c0_i32, %c0_i32_0 : i32, i32
  }
  func.func @transform_2(%arg0: i32, %arg1: i32) -> (i32, i32) {
    %c0_i32 = arith.constant 0 : i32
    %c0_i32_0 = arith.constant 0 : i32
    %c0_i32_1 = arith.constant 0 : i32
    return %c0_i32, %c0_i32_0 : i32, i32
  }
  func.func @transform_3(%arg0: i32, %arg1: i32) -> (i32, i32, i32) {
    %c0_i32 = arith.constant 0 : i32
    %c0_i32_0 = arith.constant 0 : i32
    %c0_i32_1 = arith.constant 0 : i32
    return %arg0, %c0_i32, %c0_i32_0 : i32, i32, i32
  }
  func.func @transform_4(%arg0: i32, %arg1: i32) -> (i32, i32, i32) {
    %c0_i32 = arith.constant 0 : i32
    %c0_i32_0 = arith.constant 0 : i32
    %c0_i32_1 = arith.constant 0 : i32
    return %arg0, %c0_i32, %c0_i32_0 : i32, i32, i32
  }
  func.func @transform_5(%arg0: i32, %arg1: i32) -> (i32, i32, i32) {
    %c0_i32 = arith.constant 0 : i32
    %c0_i32_0 = arith.constant 0 : i32
    %c0_i32_1 = arith.constant 0 : i32
    return %arg0, %c0_i32, %c0_i32_0 : i32, i32, i32
  }
  func.func @transform_6(%arg0: i32, %arg1: i32) -> (i32, i32, i32) {
    %c0_i32 = arith.constant 0 : i32
    %c0_i32_0 = arith.constant 0 : i32
    %c0_i32_1 = arith.constant 0 : i32
    return %arg0, %c0_i32, %c0_i32_0 : i32, i32, i32
  }
}

module attributes {stable_mosaic.version = 11 : i64} {
  func.func @_stats2_kernel(%arg0: i32, %arg1: i32, %arg2: memref<1x4x16xf32, #tpu.memory_space<vmem>>, %arg3: memref<8x4xbf16, #tpu.memory_space<vmem>>, %arg4: memref<8x1xf32, #tpu.memory_space<vmem>>, %arg5: memref<8x1xf32, #tpu.memory_space<vmem>>, %arg6: memref<8x8xbf16, #tpu.memory_space<vmem>>, %arg7: memref<1x8x1xf32, #tpu.memory_space<vmem>>, %arg8: memref<1x8x1xf32, #tpu.memory_space<vmem>>) attributes {dimension_semantics = [#tpu.dimension_semantics<parallel>, #tpu.dimension_semantics<arbitrary>], iteration_bounds = array<i64: 2, 1>, scalar_prefetch = 0 : i64, scratch_operands = 0 : i64, tpu.core_type = #tpu.core_type<tc>, window_params = [{transform_indices = @transform_0, window_bounds = array<i64: 1, 4, 16>}, {pipeline_mode = #tpu.pipeline_mode<synchronous>, transform_indices = @transform_1, window_bounds = array<i64: 8, 4>}, {pipeline_mode = #tpu.pipeline_mode<synchronous>, transform_indices = @transform_2, window_bounds = array<i64: 8, 1>}, {pipeline_mode = #tpu.pipeline_mode<synchronous>, transform_indices = @transform_3, window_bounds = array<i64: 8, 1>}, {pipeline_mode = #tpu.pipeline_mode<synchronous>, transform_indices = @transform_4, window_bounds = array<i64: 8, 8>}, {transform_indices = @transform_5, window_bounds = array<i64: 1, 8, 1>}, {transform_indices = @transform_6, window_bounds = array<i64: 1, 8, 1>}]} {
    %c0_i32 = arith.constant 0 : i32
    %0 = arith.cmpi eq, %arg1, %c0_i32 : i32
    %1 = arith.extui %0 : i1 to i32
    %c0_i32_0 = arith.constant 0 : i32
    %2 = arith.cmpi ne, %1, %c0_i32_0 : i32
    scf.if %2 {
      %cst_27 = arith.constant 0.000000e+00 : f32
      %36 = vector.broadcast %cst_27 : f32 to vector<8x1xf32>
      %c0_28 = arith.constant 0 : index
      %c0_29 = arith.constant 0 : index
      %c0_30 = arith.constant 0 : index
      %37 = vector.load %arg7[%c0_28, %c0_29, %c0_30] : memref<1x8x1xf32, #tpu.memory_space<vmem>>, vector<1x8x1xf32>
      %38 = vector.shape_cast %37 : vector<1x8x1xf32> to vector<8x1xf32>
      %39 = vector.shape_cast %36 : vector<8x1xf32> to vector<1x8x1xf32>
      tpu.vector_store %arg7[%c0_28, %c0_29, %c0_30], %39 {strides = array<i32>} : memref<1x8x1xf32, #tpu.memory_space<vmem>>, vector<1x8x1xf32>,
      %cst_31 = arith.constant 0.000000e+00 : f32
      %40 = vector.broadcast %cst_31 : f32 to vector<8x1xf32>
      %c0_32 = arith.constant 0 : index
      %c0_33 = arith.constant 0 : index
      %c0_34 = arith.constant 0 : index
      %41 = vector.load %arg8[%c0_32, %c0_33, %c0_34] : memref<1x8x1xf32, #tpu.memory_space<vmem>>, vector<1x8x1xf32>
      %42 = vector.shape_cast %41 : vector<1x8x1xf32> to vector<8x1xf32>
      %43 = vector.shape_cast %40 : vector<8x1xf32> to vector<1x8x1xf32>
      tpu.vector_store %arg8[%c0_32, %c0_33, %c0_34], %43 {strides = array<i32>} : memref<1x8x1xf32, #tpu.memory_space<vmem>>, vector<1x8x1xf32>,
    } else {
    }
    %c0 = arith.constant 0 : index
    %c0_1 = arith.constant 0 : index
    %c0_2 = arith.constant 0 : index
    %3 = vector.load %arg2[%c0, %c0_1, %c0_2] : memref<1x4x16xf32, #tpu.memory_space<vmem>>, vector<1x4x16xf32>
    %4 = vector.shape_cast %3 : vector<1x4x16xf32> to vector<4x16xf32>
    %5 = arith.truncf %4 : vector<4x16xf32> to vector<4x16xbf16>
    %c0_3 = arith.constant 0 : index
    %c0_4 = arith.constant 0 : index
    %6 = vector.load %arg3[%c0_3, %c0_4] : memref<8x4xbf16, #tpu.memory_space<vmem>>, vector<8x4xbf16>
    %cst = arith.constant dense<0.000000e+00> : vector<8x16xf32>
    %7 = tpu.matmul %6, %5, %cst {dimension_numbers = #tpu.dot_dimension_numbers<[1], [0], [0], [1], [0, 0, 1, 1], [], []>} : vector<8x4xbf16>, vector<4x16xbf16>, vector<8x16xf32> -> vector<8x16xf32>
    %c0_5 = arith.constant 0 : index
    %c0_6 = arith.constant 0 : index
    %8 = vector.load %arg4[%c0_5, %c0_6] : memref<8x1xf32, #tpu.memory_space<vmem>>, vector<8x1xf32>
    %9 = vector.broadcast %8 : vector<8x1xf32> to vector<8x16xf32>
    %10 = arith.mulf %7, %9 : vector<8x16xf32>
    %c0_7 = arith.constant 0 : index
    %c0_8 = arith.constant 0 : index
    %11 = vector.load %arg5[%c0_7, %c0_8] : memref<8x1xf32, #tpu.memory_space<vmem>>, vector<8x1xf32>
    %12 = vector.broadcast %11 : vector<8x1xf32> to vector<8x16xf32>
    %13 = arith.addf %10, %12 : vector<8x16xf32>
    %cst_9 = arith.constant 0.000000e+00 : f32
    %14 = vector.broadcast %cst_9 : f32 to vector<8x16xf32>
    %15 = arith.maximumf %13, %14 : vector<8x16xf32>
    %c0_10 = arith.constant 0 : index
    %c0_11 = arith.constant 0 : index
    %16 = vector.load %arg6[%c0_10, %c0_11] : memref<8x8xbf16, #tpu.memory_space<vmem>>, vector<8x8xbf16>
    %17 = arith.truncf %15 : vector<8x16xf32> to vector<8x16xbf16>
    %cst_12 = arith.constant dense<0.000000e+00> : vector<8x16xf32>
    %18 = tpu.matmul %16, %17, %cst_12 {dimension_numbers = #tpu.dot_dimension_numbers<[1], [0], [0], [1], [0, 0, 1, 1], [], []>} : vector<8x8xbf16>, vector<8x16xbf16>, vector<8x16xf32> -> vector<8x16xf32>
    %c0_13 = arith.constant 0 : index
    %c0_14 = arith.constant 0 : index
    %c0_15 = arith.constant 0 : index
    %19 = vector.load %arg7[%c0_13, %c0_14, %c0_15] : memref<1x8x1xf32, #tpu.memory_space<vmem>>, vector<1x8x1xf32>
    %20 = vector.shape_cast %19 : vector<1x8x1xf32> to vector<8x1xf32>
    %cst_16 = arith.constant dense<0.000000e+00> : vector<8xf32>
    %21 = vector.multi_reduction <add>, %18, %cst_16 [1] : vector<8x16xf32> to vector<8xf32>
    %22 = vector.shape_cast %21 : vector<8xf32> to vector<8x1xf32>
    %23 = arith.addf %20, %22 : vector<8x1xf32>
    %c0_17 = arith.constant 0 : index
    %c0_18 = arith.constant 0 : index
    %c0_19 = arith.constant 0 : index
    %24 = vector.load %arg7[%c0_17, %c0_18, %c0_19] : memref<1x8x1xf32, #tpu.memory_space<vmem>>, vector<1x8x1xf32>
    %25 = vector.shape_cast %24 : vector<1x8x1xf32> to vector<8x1xf32>
    %26 = vector.shape_cast %23 : vector<8x1xf32> to vector<1x8x1xf32>
    tpu.vector_store %arg7[%c0_17, %c0_18, %c0_19], %26 {strides = array<i32>} : memref<1x8x1xf32, #tpu.memory_space<vmem>>, vector<1x8x1xf32>,
    %c0_20 = arith.constant 0 : index
    %c0_21 = arith.constant 0 : index
    %c0_22 = arith.constant 0 : index
    %27 = vector.load %arg8[%c0_20, %c0_21, %c0_22] : memref<1x8x1xf32, #tpu.memory_space<vmem>>, vector<1x8x1xf32>
    %28 = vector.shape_cast %27 : vector<1x8x1xf32> to vector<8x1xf32>
    %29 = arith.mulf %18, %18 : vector<8x16xf32>
    %cst_23 = arith.constant dense<0.000000e+00> : vector<8xf32>
    %30 = vector.multi_reduction <add>, %29, %cst_23 [1] : vector<8x16xf32> to vector<8xf32>
    %31 = vector.shape_cast %30 : vector<8xf32> to vector<8x1xf32>
    %32 = arith.addf %28, %31 : vector<8x1xf32>
    %c0_24 = arith.constant 0 : index
    %c0_25 = arith.constant 0 : index
    %c0_26 = arith.constant 0 : index
    %33 = vector.load %arg8[%c0_24, %c0_25, %c0_26] : memref<1x8x1xf32, #tpu.memory_space<vmem>>, vector<1x8x1xf32>
    %34 = vector.shape_cast %33 : vector<1x8x1xf32> to vector<8x1xf32>
    %35 = vector.shape_cast %32 : vector<8x1xf32> to vector<1x8x1xf32>
    tpu.vector_store %arg8[%c0_24, %c0_25, %c0_26], %35 {strides = array<i32>} : memref<1x8x1xf32, #tpu.memory_space<vmem>>, vector<1x8x1xf32>,
    return
  }
  func.func @transform_0(%arg0: i32, %arg1: i32) -> (i32, i32, i32) {
    %c0_i32 = arith.constant 0 : i32
    %c0_i32_0 = arith.constant 0 : i32
    return %arg0, %c0_i32, %arg1 : i32, i32, i32
  }
  func.func @transform_1(%arg0: i32, %arg1: i32) -> (i32, i32) {
    %c0_i32 = arith.constant 0 : i32
    %c0_i32_0 = arith.constant 0 : i32
    %c0_i32_1 = arith.constant 0 : i32
    return %c0_i32, %c0_i32_0 : i32, i32
  }
  func.func @transform_2(%arg0: i32, %arg1: i32) -> (i32, i32) {
    %c0_i32 = arith.constant 0 : i32
    %c0_i32_0 = arith.constant 0 : i32
    %c0_i32_1 = arith.constant 0 : i32
    return %c0_i32, %c0_i32_0 : i32, i32
  }
  func.func @transform_3(%arg0: i32, %arg1: i32) -> (i32, i32) {
    %c0_i32 = arith.constant 0 : i32
    %c0_i32_0 = arith.constant 0 : i32
    %c0_i32_1 = arith.constant 0 : i32
    return %c0_i32, %c0_i32_0 : i32, i32
  }
  func.func @transform_4(%arg0: i32, %arg1: i32) -> (i32, i32) {
    %c0_i32 = arith.constant 0 : i32
    %c0_i32_0 = arith.constant 0 : i32
    %c0_i32_1 = arith.constant 0 : i32
    return %c0_i32, %c0_i32_0 : i32, i32
  }
  func.func @transform_5(%arg0: i32, %arg1: i32) -> (i32, i32, i32) {
    %c0_i32 = arith.constant 0 : i32
    %c0_i32_0 = arith.constant 0 : i32
    %c0_i32_1 = arith.constant 0 : i32
    return %arg0, %c0_i32, %c0_i32_0 : i32, i32, i32
  }
  func.func @transform_6(%arg0: i32, %arg1: i32) -> (i32, i32, i32) {
    %c0_i32 = arith.constant 0 : i32
    %c0_i32_0 = arith.constant 0 : i32
    %c0_i32_1 = arith.constant 0 : i32
    return %arg0, %c0_i32, %c0_i32_0 : i32, i32, i32
  }
}

module attributes {stable_mosaic.version = 11 : i64} {
  func.func @_final_proj_kernel(%arg0: i32, %arg1: i32, %arg2: memref<1x4x16xf32, #tpu.memory_space<vmem>>, %arg3: memref<8x4xbf16, #tpu.memory_space<vmem>>, %arg4: memref<8x1xf32, #tpu.memory_space<vmem>>, %arg5: memref<8x1xf32, #tpu.memory_space<vmem>>, %arg6: memref<8x8xbf16, #tpu.memory_space<vmem>>, %arg7: memref<8x1xf32, #tpu.memory_space<vmem>>, %arg8: memref<8x1xf32, #tpu.memory_space<vmem>>, %arg9: memref<8x4xbf16, #tpu.memory_space<vmem>>, %arg10: memref<8x1xf32, #tpu.memory_space<vmem>>, %arg11: memref<8x1xf32, #tpu.memory_space<vmem>>, %arg12: memref<1x8x16xf32, #tpu.memory_space<vmem>>) attributes {dimension_semantics = [#tpu.dimension_semantics<parallel>, #tpu.dimension_semantics<parallel>], iteration_bounds = array<i64: 2, 1>, scalar_prefetch = 0 : i64, scratch_operands = 0 : i64, tpu.core_type = #tpu.core_type<tc>, window_params = [{transform_indices = @transform_0, window_bounds = array<i64: 1, 4, 16>}, {pipeline_mode = #tpu.pipeline_mode<synchronous>, transform_indices = @transform_1, window_bounds = array<i64: 8, 4>}, {pipeline_mode = #tpu.pipeline_mode<synchronous>, transform_indices = @transform_2, window_bounds = array<i64: 8, 1>}, {pipeline_mode = #tpu.pipeline_mode<synchronous>, transform_indices = @transform_3, window_bounds = array<i64: 8, 1>}, {pipeline_mode = #tpu.pipeline_mode<synchronous>, transform_indices = @transform_4, window_bounds = array<i64: 8, 8>}, {pipeline_mode = #tpu.pipeline_mode<synchronous>, transform_indices = @transform_5, window_bounds = array<i64: 8, 1>}, {pipeline_mode = #tpu.pipeline_mode<synchronous>, transform_indices = @transform_6, window_bounds = array<i64: 8, 1>}, {pipeline_mode = #tpu.pipeline_mode<synchronous>, transform_indices = @transform_7, window_bounds = array<i64: 8, 4>}, {pipeline_mode = #tpu.pipeline_mode<synchronous>, transform_indices = @transform_8, window_bounds = array<i64: 8, 1>}, {pipeline_mode = #tpu.pipeline_mode<synchronous>, transform_indices = @transform_9, window_bounds = array<i64: 8, 1>}, {transform_indices = @transform_10, window_bounds = array<i64: 1, 8, 16>}]} {
    %c0 = arith.constant 0 : index
    %c0_0 = arith.constant 0 : index
    %c0_1 = arith.constant 0 : index
    %0 = vector.load %arg2[%c0, %c0_0, %c0_1] : memref<1x4x16xf32, #tpu.memory_space<vmem>>, vector<1x4x16xf32>
    %1 = vector.shape_cast %0 : vector<1x4x16xf32> to vector<4x16xf32>
    %2 = arith.truncf %1 : vector<4x16xf32> to vector<4x16xbf16>
    %c0_2 = arith.constant 0 : index
    %c0_3 = arith.constant 0 : index
    %3 = vector.load %arg9[%c0_2, %c0_3] : memref<8x4xbf16, #tpu.memory_space<vmem>>, vector<8x4xbf16>
    %cst = arith.constant dense<0.000000e+00> : vector<8x16xf32>
    %4 = tpu.matmul %3, %2, %cst {dimension_numbers = #tpu.dot_dimension_numbers<[1], [0], [0], [1], [0, 0, 1, 1], [], []>} : vector<8x4xbf16>, vector<4x16xbf16>, vector<8x16xf32> -> vector<8x16xf32>
    %c0_4 = arith.constant 0 : index
    %c0_5 = arith.constant 0 : index
    %5 = vector.load %arg10[%c0_4, %c0_5] : memref<8x1xf32, #tpu.memory_space<vmem>>, vector<8x1xf32>
    %6 = vector.broadcast %5 : vector<8x1xf32> to vector<8x16xf32>
    %7 = arith.mulf %4, %6 : vector<8x16xf32>
    %c0_6 = arith.constant 0 : index
    %c0_7 = arith.constant 0 : index
    %8 = vector.load %arg11[%c0_6, %c0_7] : memref<8x1xf32, #tpu.memory_space<vmem>>, vector<8x1xf32>
    %9 = vector.broadcast %8 : vector<8x1xf32> to vector<8x16xf32>
    %10 = arith.addf %7, %9 : vector<8x16xf32>
    %c0_8 = arith.constant 0 : index
    %c0_9 = arith.constant 0 : index
    %11 = vector.load %arg3[%c0_8, %c0_9] : memref<8x4xbf16, #tpu.memory_space<vmem>>, vector<8x4xbf16>
    %cst_10 = arith.constant dense<0.000000e+00> : vector<8x16xf32>
    %12 = tpu.matmul %11, %2, %cst_10 {dimension_numbers = #tpu.dot_dimension_numbers<[1], [0], [0], [1], [0, 0, 1, 1], [], []>} : vector<8x4xbf16>, vector<4x16xbf16>, vector<8x16xf32> -> vector<8x16xf32>
    %c0_11 = arith.constant 0 : index
    %c0_12 = arith.constant 0 : index
    %13 = vector.load %arg4[%c0_11, %c0_12] : memref<8x1xf32, #tpu.memory_space<vmem>>, vector<8x1xf32>
    %14 = vector.broadcast %13 : vector<8x1xf32> to vector<8x16xf32>
    %15 = arith.mulf %12, %14 : vector<8x16xf32>
    %c0_13 = arith.constant 0 : index
    %c0_14 = arith.constant 0 : index
    %16 = vector.load %arg5[%c0_13, %c0_14] : memref<8x1xf32, #tpu.memory_space<vmem>>, vector<8x1xf32>
    %17 = vector.broadcast %16 : vector<8x1xf32> to vector<8x16xf32>
    %18 = arith.addf %15, %17 : vector<8x16xf32>
    %cst_15 = arith.constant 0.000000e+00 : f32
    %19 = vector.broadcast %cst_15 : f32 to vector<8x16xf32>
    %20 = arith.maximumf %18, %19 : vector<8x16xf32>
    %c0_16 = arith.constant 0 : index
    %c0_17 = arith.constant 0 : index
    %21 = vector.load %arg6[%c0_16, %c0_17] : memref<8x8xbf16, #tpu.memory_space<vmem>>, vector<8x8xbf16>
    %22 = arith.truncf %20 : vector<8x16xf32> to vector<8x16xbf16>
    %cst_18 = arith.constant dense<0.000000e+00> : vector<8x16xf32>
    %23 = tpu.matmul %21, %22, %cst_18 {dimension_numbers = #tpu.dot_dimension_numbers<[1], [0], [0], [1], [0, 0, 1, 1], [], []>} : vector<8x8xbf16>, vector<8x16xbf16>, vector<8x16xf32> -> vector<8x16xf32>
    %c0_19 = arith.constant 0 : index
    %c0_20 = arith.constant 0 : index
    %24 = vector.load %arg7[%c0_19, %c0_20] : memref<8x1xf32, #tpu.memory_space<vmem>>, vector<8x1xf32>
    %25 = vector.broadcast %24 : vector<8x1xf32> to vector<8x16xf32>
    %26 = arith.mulf %23, %25 : vector<8x16xf32>
    %c0_21 = arith.constant 0 : index
    %c0_22 = arith.constant 0 : index
    %27 = vector.load %arg8[%c0_21, %c0_22] : memref<8x1xf32, #tpu.memory_space<vmem>>, vector<8x1xf32>
    %28 = vector.broadcast %27 : vector<8x1xf32> to vector<8x16xf32>
    %29 = arith.addf %26, %28 : vector<8x16xf32>
    %30 = arith.addf %29, %10 : vector<8x16xf32>
    %cst_23 = arith.constant 0.000000e+00 : f32
    %31 = vector.broadcast %cst_23 : f32 to vector<8x16xf32>
    %32 = arith.maximumf %30, %31 : vector<8x16xf32>
    %c0_24 = arith.constant 0 : index
    %c0_25 = arith.constant 0 : index
    %c0_26 = arith.constant 0 : index
    %33 = vector.load %arg12[%c0_24, %c0_25, %c0_26] : memref<1x8x16xf32, #tpu.memory_space<vmem>>, vector<1x8x16xf32>
    %34 = vector.shape_cast %33 : vector<1x8x16xf32> to vector<8x16xf32>
    %35 = vector.shape_cast %32 : vector<8x16xf32> to vector<1x8x16xf32>
    tpu.vector_store %arg12[%c0_24, %c0_25, %c0_26], %35 {strides = array<i32>} : memref<1x8x16xf32, #tpu.memory_space<vmem>>, vector<1x8x16xf32>,
    return
  }
  func.func @transform_0(%arg0: i32, %arg1: i32) -> (i32, i32, i32) {
    %c0_i32 = arith.constant 0 : i32
    %c0_i32_0 = arith.constant 0 : i32
    return %arg0, %c0_i32, %arg1 : i32, i32, i32
  }
  func.func @transform_1(%arg0: i32, %arg1: i32) -> (i32, i32) {
    %c0_i32 = arith.constant 0 : i32
    %c0_i32_0 = arith.constant 0 : i32
    %c0_i32_1 = arith.constant 0 : i32
    return %c0_i32, %c0_i32_0 : i32, i32
  }
  func.func @transform_2(%arg0: i32, %arg1: i32) -> (i32, i32) {
    %c0_i32 = arith.constant 0 : i32
    %c0_i32_0 = arith.constant 0 : i32
    %c0_i32_1 = arith.constant 0 : i32
    return %c0_i32, %c0_i32_0 : i32, i32
  }
  func.func @transform_3(%arg0: i32, %arg1: i32) -> (i32, i32) {
    %c0_i32 = arith.constant 0 : i32
    %c0_i32_0 = arith.constant 0 : i32
    %c0_i32_1 = arith.constant 0 : i32
    return %c0_i32, %c0_i32_0 : i32, i32
  }
  func.func @transform_4(%arg0: i32, %arg1: i32) -> (i32, i32) {
    %c0_i32 = arith.constant 0 : i32
    %c0_i32_0 = arith.constant 0 : i32
    %c0_i32_1 = arith.constant 0 : i32
    return %c0_i32, %c0_i32_0 : i32, i32
  }
  func.func @transform_5(%arg0: i32, %arg1: i32) -> (i32, i32) {
    %c0_i32 = arith.constant 0 : i32
    %c0_i32_0 = arith.constant 0 : i32
    %c0_i32_1 = arith.constant 0 : i32
    return %c0_i32, %c0_i32_0 : i32, i32
  }
  func.func @transform_6(%arg0: i32, %arg1: i32) -> (i32, i32) {
    %c0_i32 = arith.constant 0 : i32
    %c0_i32_0 = arith.constant 0 : i32
    %c0_i32_1 = arith.constant 0 : i32
    return %c0_i32, %c0_i32_0 : i32, i32
  }
  func.func @transform_7(%arg0: i32, %arg1: i32) -> (i32, i32) {
    %c0_i32 = arith.constant 0 : i32
    %c0_i32_0 = arith.constant 0 : i32
    %c0_i32_1 = arith.constant 0 : i32
    return %c0_i32, %c0_i32_0 : i32, i32
  }
  func.func @transform_8(%arg0: i32, %arg1: i32) -> (i32, i32) {
    %c0_i32 = arith.constant 0 : i32
    %c0_i32_0 = arith.constant 0 : i32
    %c0_i32_1 = arith.constant 0 : i32
    return %c0_i32, %c0_i32_0 : i32, i32
  }
  func.func @transform_9(%arg0: i32, %arg1: i32) -> (i32, i32) {
    %c0_i32 = arith.constant 0 : i32
    %c0_i32_0 = arith.constant 0 : i32
    %c0_i32_1 = arith.constant 0 : i32
    return %c0_i32, %c0_i32_0 : i32, i32
  }
  func.func @transform_10(%arg0: i32, %arg1: i32) -> (i32, i32, i32) {
    %c0_i32 = arith.constant 0 : i32
    %c0_i32_0 = arith.constant 0 : i32
    return %arg0, %c0_i32, %arg1 : i32, i32, i32
  }
}

</mosaic_0001>

<llo_original>
// kernel: residual_block_forward.3
$region0: #{residual_block_forward.3}
  #allocation0 [shape = 'u32[]', space=smem, size = 0x4, offset = 0x4, fixed_abs, tag = 'smem constant byte address 0x4 - core index']
  #allocation1 [shape = 'u32[72,128]{1,0:T(1,128)}', space=vmem, size = 0x9000, scoped, tag = 'internal scratch']
  %s0 = inlined_call_operand.vmem [shape: f32[2,4,16], index: 0, kind: input, shape index: {}]
  %s1 = inlined_call_operand.vmem [shape: bf16[8,4], index: 1, kind: input, shape index: {}]
  %s2 = inlined_call_operand.vmem [shape: bf16[8,4], index: 2, kind: input, shape index: {}]
  %s3 = inlined_call_operand.vmem [shape: f32[2,8,1], index: 3, kind: output, shape index: {0}]
  %s4 = inlined_call_operand.vmem [shape: f32[2,8,1], index: 4, kind: output, shape index: {1}]
  %s5 = inlined_call_operand.vmem [shape: f32[2,8,1], index: 5, kind: output, shape index: {2}]
  %s6 = inlined_call_operand.vmem [shape: f32[2,8,1], index: 6, kind: output, shape index: {3}]
  %7 = xla_tuple %s3, %s4, %s5, %s6
  %s8 = sld [smem:[#allocation0]]
  $region73: #{residual_block_forward.3} parent=0
    _
  %s10 = ssub.s32 1, %s8
  %s11 = scalar_select 0, %s10, %s8
  loop: start=0, step=1, limit=4
  $region2: #{residual_block_forward.3} parent=0 // loop_pre_header
    _
  $region3: #{residual_block_forward.3} parent=0 // loop_header
    %s13 = sphi 0, %s17
    %p14 = scmp.ge.s32.totalorder %s13, 4
    %s20 = sphi 0, %s32
    %s21 = sphi 0, %s28
    %s22 = sphi 0, %s20
    %s23 = sphi 0, %s21
    %s24 = sphi 0, %s22
    %s25 = sphi 0, %s23
    %s37 = sphi 0, %s39
    %s40 = sphi 0, %s37
    %s41 = sphi 0, %s40
    %s57 = sphi 0, %s41
    %s61 = sphi 0, %s61
    %s63 = sphi 0, %s61
    %s64 = sphi 0, %s63
    %s78 = sphi 0, %s64
    %s82 = sphi 0, %s82
    %s84 = sphi 0, %s82
    %s85 = sphi 0, %s84
    %s99 = sphi 0, %s85
    %s105 = sphi 0, %s107
    %s108 = sphi 0, %s105
    %s109 = sphi 0, %s108
    %s125 = sphi 0, %s109
    %s131 = sphi 0, %s133
    %s134 = sphi 0, %s131
    %s135 = sphi 0, %s134
    %s151 = sphi 0, %s135
    %s157 = sphi 0, %s159
    %s160 = sphi 0, %s157
    %s161 = sphi 0, %s160
    %s177 = sphi 0, %s161
    %s183 = sphi 0, %s185
    %s186 = sphi 0, %s183
    %s187 = sphi 0, %s186
    %s203 = sphi 0, %s187
  $region4: #{residual_block_forward.3} parent=0 // loop_header_branch
    %16 = sbr.rel (%p14) target = $region8
  $region5: #{residual_block_forward.3} parent=0 // loop_body
    %s18 = ssub.s32 %s13, 1
    %s19 = ssub.s32 %s13, 2
    %s26 = sadd.s32 1, %s21
    %p27 = scmp.ge.s32.totalorder %s26, 1
    %s28 = scalar_select %p27, 0, %s26
    %s29 = sadd.s32 1, %s20
    %s30 = scalar_select %p27, %s29, %s20
    %p31 = scmp.ge.s32.totalorder %s30, 2
    %s32 = scalar_select %p31, 0, %s30
    %s33 = ssub.s32 %s20, %s32
    %s34 = ssub.s32 %s21, %s28
    %s35 = sor.u32 %s33, %s34
    %p36 = scmp.eq.s32.totalorder %s35, 0
    %s38 = sadd.s32 %s37, 1
    %s39 = scalar_select %p36, %s37, %s38
    %p42 = pneg %p36
    %p43 = scmp.eq.s32.totalorder %s13, 1
    %p44 = por %p42, %p43
    %p45 = scmp.ne.s32.totalorder %s37, %s40
    %p46 = scmp.eq.s32.totalorder %s13, 0
    %p47 = por %p45, %p46
    %p48 = scmp.ne.s32.totalorder %s37, %s40
    %p49 = scmp.eq.s32.totalorder %s18, 1
    %p50 = por %p48, %p49
    %p51 = scmp.ne.s32.totalorder %s40, %s41
    %p52 = scmp.eq.s32.totalorder %s18, 0
    %p53 = por %p51, %p52
    %p54 = scmp.ne.s32.totalorder %s40, %s41
    %p55 = scmp.eq.s32.totalorder %s19, 1
    %p56 = por %p54, %p55
    %p58 = scmp.ne.s32.totalorder %s41, %s57
    %p59 = scmp.eq.s32.totalorder %s19, 0
    %p60 = por %p58, %p59
    %s62 = sadd.s32 %s61, 1
    %p65 = scmp.eq.s32.totalorder %s13, 1
    %p66 = scmp.ne.s32.totalorder %s61, %s63
    %p67 = scmp.eq.s32.totalorder %s13, 0
    %p68 = por %p66, %p67
    %p69 = scmp.ne.s32.totalorder %s61, %s63
    %p70 = scmp.eq.s32.totalorder %s18, 1
    %p71 = por %p69, %p70
    %p72 = scmp.ne.s32.totalorder %s63, %s64
    %p73 = scmp.eq.s32.totalorder %s18, 0
    %p74 = por %p72, %p73
    %p75 = scmp.ne.s32.totalorder %s63, %s64
    %p76 = scmp.eq.s32.totalorder %s19, 1
    %p77 = por %p75, %p76
    %p79 = scmp.ne.s32.totalorder %s64, %s78
    %p80 = scmp.eq.s32.totalorder %s19, 0
    %p81 = por %p79, %p80
    %s83 = sadd.s32 %s82, 1
    %p86 = scmp.eq.s32.totalorder %s13, 1
    %p87 = scmp.ne.s32.totalorder %s82, %s84
    %p88 = scmp.eq.s32.totalorder %s13, 0
    %p89 = por %p87, %p88
    %p90 = scmp.ne.s32.totalorder %s82, %s84
    %p91 = scmp.eq.s32.totalorder %s18, 1
    %p92 = por %p90, %p91
    %p93 = scmp.ne.s32.totalorder %s84, %s85
    %p94 = scmp.eq.s32.totalorder %s18, 0
    %p95 = por %p93, %p94
    %p96 = scmp.ne.s32.totalorder %s84, %s85
    %p97 = scmp.eq.s32.totalorder %s19, 1
    %p98 = por %p96, %p97
    %p100 = scmp.ne.s32.totalorder %s85, %s99
    %p101 = scmp.eq.s32.totalorder %s19, 0
    %p102 = por %p100, %p101
    %s103 = ssub.s32 %s20, %s32
    %p104 = scmp.eq.s32.totalorder %s103, 0
    %s106 = sadd.s32 %s105, 1
    %s107 = scalar_select %p104, %s105, %s106
    %p110 = pneg %p104
    %p111 = scmp.eq.s32.totalorder %s13, 1
    %p112 = por %p110, %p111
    %p113 = scmp.ne.s32.totalorder %s105, %s108
    %p114 = scmp.eq.s32.totalorder %s13, 0
    %p115 = por %p113, %p114
    %p116 = scmp.ne.s32.totalorder %s105, %s108
    %p117 = scmp.eq.s32.totalorder %s18, 1
    %p118 = por %p116, %p117
    %p119 = scmp.ne.s32.totalorder %s108, %s109
    %p120 = scmp.eq.s32.totalorder %s18, 0
    %p121 = por %p119, %p120
    %p122 = scmp.ne.s32.totalorder %s108, %s109
    %p123 = scmp.eq.s32.totalorder %s19, 1
    %p124 = por %p122, %p123
    %p126 = scmp.ne.s32.totalorder %s109, %s125
    %p127 = scmp.eq.s32.totalorder %s19, 0
    %p128 = por %p126, %p127
    %s129 = ssub.s32 %s20, %s32
    %p130 = scmp.eq.s32.totalorder %s129, 0
    %s132 = sadd.s32 %s131, 1
    %s133 = scalar_select %p130, %s131, %s132
    %p136 = pneg %p130
    %p137 = scmp.eq.s32.totalorder %s13, 1
    %p138 = por %p136, %p137
    %p139 = scmp.ne.s32.totalorder %s131, %s134
    %p140 = scmp.eq.s32.totalorder %s13, 0
    %p141 = por %p139, %p140
    %p142 = scmp.ne.s32.totalorder %s131, %s134
    %p143 = scmp.eq.s32.totalorder %s18, 1
    %p144 = por %p142, %p143
    %p145 = scmp.ne.s32.totalorder %s134, %s135
    %p146 = scmp.eq.s32.totalorder %s18, 0
    %p147 = por %p145, %p146
    %p148 = scmp.ne.s32.totalorder %s134, %s135
    %p149 = scmp.eq.s32.totalorder %s19, 1
    %p150 = por %p148, %p149
    %p152 = scmp.ne.s32.totalorder %s135, %s151
    %p153 = scmp.eq.s32.totalorder %s19, 0
    %p154 = por %p152, %p153
    %s155 = ssub.s32 %s20, %s32
    %p156 = scmp.eq.s32.totalorder %s155, 0
    %s158 = sadd.s32 %s157, 1
    %s159 = scalar_select %p156, %s157, %s158
    %p162 = pneg %p156
    %p163 = scmp.eq.s32.totalorder %s13, 1
    %p164 = por %p162, %p163
    %p165 = scmp.ne.s32.totalorder %s157, %s160
    %p166 = scmp.eq.s32.totalorder %s13, 0
    %p167 = por %p165, %p166
    %p168 = scmp.ne.s32.totalorder %s157, %s160
    %p169 = scmp.eq.s32.totalorder %s18, 1
    %p170 = por %p168, %p169
    %p171 = scmp.ne.s32.totalorder %s160, %s161
    %p172 = scmp.eq.s32.totalorder %s18, 0
    %p173 = por %p171, %p172
    %p174 = scmp.ne.s32.totalorder %s160, %s161
    %p175 = scmp.eq.s32.totalorder %s19, 1
    %p176 = por %p174, %p175
    %p178 = scmp.ne.s32.totalorder %s161, %s177
    %p179 = scmp.eq.s32.totalorder %s19, 0
    %p180 = por %p178, %p179
    %s181 = ssub.s32 %s20, %s32
    %p182 = scmp.eq.s32.totalorder %s181, 0
    %s184 = sadd.s32 %s183, 1
    %s185 = scalar_select %p182, %s183, %s184
    %p188 = pneg %p182
    %p189 = scmp.eq.s32.totalorder %s13, 1
    %p190 = por %p188, %p189
    %p191 = scmp.ne.s32.totalorder %s183, %s186
    %p192 = scmp.eq.s32.totalorder %s13, 0
    %p193 = por %p191, %p192
    %p194 = scmp.ne.s32.totalorder %s183, %s186
    %p195 = scmp.eq.s32.totalorder %s18, 1
    %p196 = por %p194, %p195
    %p197 = scmp.ne.s32.totalorder %s186, %s187
    %p198 = scmp.eq.s32.totalorder %s18, 0
    %p199 = por %p197, %p198
    %p200 = scmp.ne.s32.totalorder %s186, %s187
    %p201 = scmp.eq.s32.totalorder %s19, 1
    %p202 = por %p200, %p201
    %p204 = scmp.ne.s32.totalorder %s187, %s203
    %p205 = scmp.eq.s32.totalorder %s19, 0
    %p206 = por %p204, %p205
    %p207 = scmp.le.s32.totalorder 1, %s13
    %p208 = scmp.lt.s32.totalorder %s13, 3
    %p209 = pnand %p207, %p208
    %p210 = pneg %p209
    // Predicated region
    $region9: #{residual_block_forward.3} parent=5 // pred_check
      _
    $region10: #{residual_block_forward.3} parent=5 // pred_check_branch
      %212 = sbr.rel (%p209) target = $region12
    $region11: #{residual_block_forward.3} parent=5 // pred_region
      %s213 = ssub.s32 %s13, 1
      // Predicated region
      $region13: #{residual_block_forward.3} parent=11 // pred_check
        %p214 = pneg %p74
      $region14: #{residual_block_forward.3} parent=11 // pred_check_branch
        %216 = sbr.rel (%p214) target = $region16
      $region15: #{residual_block_forward.3} parent=11 // pred_region
        _
      $region16: #{residual_block_forward.3} parent=11 // pred_fallthru
        _
      // Predicated region
      $region17: #{residual_block_forward.3} parent=11 // pred_check
        %p217 = pneg %p95
      $region18: #{residual_block_forward.3} parent=11 // pred_check_branch
        %219 = sbr.rel (%p217) target = $region20
      $region19: #{residual_block_forward.3} parent=11 // pred_region
        _
      $region20: #{residual_block_forward.3} parent=11 // pred_fallthru
        _
    $region12: #{residual_block_forward.3} parent=5 // pred_fallthru
      _
    %p220 = scmp.lt.s32.totalorder %s13, 2
    // Predicated region
    $region21: #{residual_block_forward.3} parent=5 // pred_check
      %p221 = pneg %p220
    $region22: #{residual_block_forward.3} parent=5 // pred_check_branch
      %223 = sbr.rel (%p221) target = $region24
    $region23: #{residual_block_forward.3} parent=5 // pred_region
      // Predicated region
      $region25: #{residual_block_forward.3} parent=23 // pred_check
        %p224 = pneg %p47
      $region26: #{residual_block_forward.3} parent=23 // pred_check_branch
        %226 = sbr.rel (%p224) target = $region28
      $region27: #{residual_block_forward.3} parent=23 // pred_region
        %p227 = scmp.lt.s32.totalorder %s20, 1
        %s228 = scalar_select %p227, %s20, 1
        %p229 = scmp.lt.s32.totalorder %s21, 0
        %s230 = scalar_select %p229, %s21, 0
        %s231 = sadd.s32 %s230, %s228
        %s232 = smul.addr %s231, 4
        %s233 = scalar_lea.vmem %s0, %s232
      $region28: #{residual_block_forward.3} parent=23 // pred_fallthru
        _
    $region24: #{residual_block_forward.3} parent=5 // pred_fallthru
      _
    %p234 = scmp.le.s32.totalorder 1, %s13
    %p235 = scmp.lt.s32.totalorder %s13, 3
    %p236 = pnand %p234, %p235
    %p237 = pneg %p236
    // Predicated region
    $region29: #{residual_block_forward.3} parent=5 // pred_check
      _
    $region30: #{residual_block_forward.3} parent=5 // pred_check_branch
      %239 = sbr.rel (%p236) target = $region32
    $region31: #{residual_block_forward.3} parent=5 // pred_region
      %s240 = ssub.s32 %s13, 1
      %p241 = scmp.lt.s32.totalorder %s22, 1
      %s242 = scalar_select %p241, %s22, 1
      %p243 = scmp.lt.s32.totalorder %s23, 0
      %s244 = scalar_select %p243, %s23, 0
      %s245 = sadd.s32 %s244, %s242
      %s246 = smul.addr %s245, 4
      %s247 = scalar_lea.vmem %s0, %s246
      %p248 = pneg %p53
      %p249 = pneg %p50
      %p250 = pneg %p74
      %p251 = pneg %p71
      %p252 = pneg %p95
      %p253 = pneg %p92
      %p254 = pneg %p121
      %p255 = pneg %p118
      %p256 = scmp.lt.s32.totalorder %s22, 1
      %s257 = scalar_select %p256, %s22, 1
      %s258 = smul.addr %s257, 8
      %s259 = scalar_lea.vmem %s3, %s258
      %p260 = pneg %p147
      %p261 = pneg %p144
      %p262 = scmp.lt.s32.totalorder %s22, 1
      %s263 = scalar_select %p262, %s22, 1
      %s264 = smul.addr %s263, 8
      %s265 = scalar_lea.vmem %s4, %s264
      %p266 = pneg %p173
      %p267 = pneg %p170
      %p268 = scmp.lt.s32.totalorder %s22, 1
      %s269 = scalar_select %p268, %s22, 1
      %s270 = smul.addr %s269, 8
      %s271 = scalar_lea.vmem %s5, %s270
      %p272 = pneg %p199
      %p273 = pneg %p196
      %p274 = scmp.lt.s32.totalorder %s22, 1
      %s275 = scalar_select %p274, %s22, 1
      %s276 = smul.addr %s275, 8
      %s277 = scalar_lea.vmem %s6, %s276
      %p278 = scmp.lt.s32.totalorder %s22, 1
      %s279 = scalar_select %p278, %s22, 1
      %p280 = scmp.lt.s32.totalorder %s23, 0
      %s281 = scalar_select %p280, %s23, 0
      %s282 = sadd.s32 %s281, %s279
      %s283 = smul.addr %s282, 4
      %s284 = scalar_lea.vmem %s0, %s283
      %p285 = scmp.lt.s32.totalorder %s22, 1
      %s286 = scalar_select %p285, %s22, 1
      %s287 = smul.addr %s286, 8
      %s288 = scalar_lea.vmem %s3, %s287
      %p289 = scmp.lt.s32.totalorder %s22, 1
      %s290 = scalar_select %p289, %s22, 1
      %s291 = smul.addr %s290, 8
      %s292 = scalar_lea.vmem %s4, %s291
      %p293 = scmp.lt.s32.totalorder %s22, 1
      %s294 = scalar_select %p293, %s22, 1
      %s295 = smul.addr %s294, 8
      %s296 = scalar_lea.vmem %s5, %s295
      %p297 = scmp.lt.s32.totalorder %s22, 1
      %s298 = scalar_select %p297, %s22, 1
      %s299 = smul.addr %s298, 8
      %s300 = scalar_lea.vmem %s6, %s299
      %p302 = scmp.eq.s32.totalorder %s23, 0
      // Predicated region
      $region33: #{residual_block_forward.3} parent=31 // pred_check
        %p303 = pneg %p302
      $region34: #{residual_block_forward.3} parent=31 // pred_check_branch
        %305 = sbr.rel (%p303) target = $region36
      $region35: #{residual_block_forward.3} parent=31 // pred_region
        %vm306 = vcmask 7168
        %307 = vst.msk [vmem:[%s288] sm:$0xff] %vm306, 0.0
        %308 = vst.msk [vmem:[%s292] sm:$0xff] %vm306, 0.0
        %309 = vst.msk [vmem:[%s296] sm:$0xff] %vm306, 0.0
        %310 = vst.msk [vmem:[%s300] sm:$0xff] %vm306, 0.0
      $region36: #{residual_block_forward.3} parent=31 // pred_fallthru
        _
      %v311 = vld [vmem:[%s284] sm:$0xf]
      %v312 = vpack.c.bf16 %v311, %v311
      %v313 = vld [vmem:[%s1] sm:$0xf]
      %vm314 = vcmask 31744
      %v316 = vsel %vm314, %v313, 0
      %vm318 = vcmask 1041408
      %v320 = vsel %vm318, %v312, 0
      %322 = vmatpush.bf16.msra.mxu0 0
      %323 = vmatpush.bf16.msra.mxu0 0
      %324 = vmatpush.bf16.msra.mxu0 0
      %325 = vmatpush.bf16.msra.mxu0 0
      %326 = vmatpush.bf16.msra.mxu0 0
      %327 = vmatpush.bf16.msra.mxu0 0
      %328 = vmatpush.bf16.msra.mxu0 0
      %329 = vmatpush.bf16.msra.mxu0 %v320
      %330 = vmatmul.bf16.gmra.mxu0 %v316
      %v331 = vpop.f32.mrf.mxu0
      %v332 = vadd.f32 0.0, %v331
      %v333 = vpop.f32.mrf.mxu0
      %334 = vdwg.mxu0
      %v335 = vld [vmem:[%s2] sm:$0xf]
      %v337 = vsel %vm314, %v335, 0
      %339 = vmatpush.bf16.msra.mxu0 0
      %340 = vmatpush.bf16.msra.mxu0 0
      %341 = vmatpush.bf16.msra.mxu0 0
      %342 = vmatpush.bf16.msra.mxu0 0
      %343 = vmatpush.bf16.msra.mxu0 0
      %344 = vmatpush.bf16.msra.mxu0 0
      %345 = vmatpush.bf16.msra.mxu0 0
      %346 = vmatpush.bf16.msra.mxu0 %v320
      %347 = vmatmul.bf16.gmra.mxu0 %v337
      %v348 = vpop.f32.mrf.mxu0
      %v349 = vadd.f32 0.0, %v348
      %v350 = vpop.f32.mrf.mxu0
      %351 = vdwg.mxu0
      %v352 = vld [vmem:[%s288] sm:$0xff]
      %vm353 = vcmask 130048
      %v354 = vsel %vm353, %v332, 0.0
      %355 = vadd.xlane.f32.xlu0 %v354
      %v356 = vpop.xlane.xlu0 %355
      %v357 = vadd.f32 %v352, %v356
      %vm358 = vcmask 7168
      %359 = vst.msk [vmem:[%s288] sm:$0xff] %vm358, %v357
      %v360 = vld [vmem:[%s292] sm:$0xff]
      %v361 = vmul.f32 %v332, %v332
      %v362 = vsel %vm353, %v361, 0.0
      %363 = vadd.xlane.f32.xlu0 %v362
      %v364 = vpop.xlane.xlu0 %363
      %v365 = vadd.f32 %v360, %v364
      %366 = vst.msk [vmem:[%s292] sm:$0xff] %vm358, %v365
      %v367 = vld [vmem:[%s296] sm:$0xff]
      %v368 = vsel %vm353, %v349, 0.0
      %369 = vadd.xlane.f32.xlu0 %v368
      %v370 = vpop.xlane.xlu0 %369
      %v371 = vadd.f32 %v367, %v370
      %372 = vst.msk [vmem:[%s296] sm:$0xff] %vm358, %v371
      %v373 = vld [vmem:[%s300] sm:$0xff]
      %v374 = vmul.f32 %v349, %v349
      %v375 = vsel %vm353, %v374, 0.0
      %376 = vadd.xlane.f32.xlu0 %v375
      %v377 = vpop.xlane.xlu0 %376
      %v378 = vadd.f32 %v373, %v377
      %379 = vst.msk [vmem:[%s300] sm:$0xff] %vm358, %v378
      %p380 = scmp.lt.s32.totalorder %s22, 1
      %s381 = scalar_select %p380, %s22, 1
      %s382 = smul.addr %s381, 8
      %s383 = scalar_lea.vmem %s3, %s382
      %p384 = scmp.lt.s32.totalorder %s22, 1
      %s385 = scalar_select %p384, %s22, 1
      %s386 = smul.addr %s385, 8
      %s387 = scalar_lea.vmem %s4, %s386
      %p388 = scmp.lt.s32.totalorder %s22, 1
      %s389 = scalar_select %p388, %s22, 1
      %s390 = smul.addr %s389, 8
      %s391 = scalar_lea.vmem %s5, %s390
      %p392 = scmp.lt.s32.totalorder %s22, 1
      %s393 = scalar_select %p392, %s22, 1
      %s394 = smul.addr %s393, 8
      %s395 = scalar_lea.vmem %s6, %s394
      // Predicated region
      $region37: #{residual_block_forward.3} parent=31 // pred_check
        %p396 = pneg %p118
      $region38: #{residual_block_forward.3} parent=31 // pred_check_branch
        %398 = sbr.rel (%p396) target = $region40
      $region39: #{residual_block_forward.3} parent=31 // pred_region
        _
      $region40: #{residual_block_forward.3} parent=31 // pred_fallthru
        _
      // Predicated region
      $region41: #{residual_block_forward.3} parent=31 // pred_check
        %p399 = pneg %p144
      $region42: #{residual_block_forward.3} parent=31 // pred_check_branch
        %401 = sbr.rel (%p399) target = $region44
      $region43: #{residual_block_forward.3} parent=31 // pred_region
        _
      $region44: #{residual_block_forward.3} parent=31 // pred_fallthru
        _
      // Predicated region
      $region45: #{residual_block_forward.3} parent=31 // pred_check
        %p402 = pneg %p170
      $region46: #{residual_block_forward.3} parent=31 // pred_check_branch
        %404 = sbr.rel (%p402) target = $region48
      $region47: #{residual_block_forward.3} parent=31 // pred_region
        _
      $region48: #{residual_block_forward.3} parent=31 // pred_fallthru
        _
      // Predicated region
      $region49: #{residual_block_forward.3} parent=31 // pred_check
        %p405 = pneg %p196
      $region50: #{residual_block_forward.3} parent=31 // pred_check_branch
        %407 = sbr.rel (%p405) target = $region52
      $region51: #{residual_block_forward.3} parent=31 // pred_region
        _
      $region52: #{residual_block_forward.3} parent=31 // pred_fallthru
        _
    $region32: #{residual_block_forward.3} parent=5 // pred_fallthru
      _
    %p408 = scmp.le.s32.totalorder 2, %s13
    // Predicated region
    $region53: #{residual_block_forward.3} parent=5 // pred_check
      %p409 = pneg %p408
    $region54: #{residual_block_forward.3} parent=5 // pred_check_branch
      %411 = sbr.rel (%p409) target = $region56
    $region55: #{residual_block_forward.3} parent=5 // pred_region
      %s412 = ssub.s32 %s13, 2
      // Predicated region
      $region57: #{residual_block_forward.3} parent=55 // pred_check
        %p413 = pneg %p124
      $region58: #{residual_block_forward.3} parent=55 // pred_check_branch
        %415 = sbr.rel (%p413) target = $region60
      $region59: #{residual_block_forward.3} parent=55 // pred_region
        %p416 = scmp.lt.s32.totalorder %s24, 1
        %s417 = scalar_select %p416, %s24, 1
        %s418 = smul.addr %s417, 8
        %s419 = scalar_lea.vmem %s3, %s418
      $region60: #{residual_block_forward.3} parent=55 // pred_fallthru
        _
      // Predicated region
      $region61: #{residual_block_forward.3} parent=55 // pred_check
        %p420 = pneg %p150
      $region62: #{residual_block_forward.3} parent=55 // pred_check_branch
        %422 = sbr.rel (%p420) target = $region64
      $region63: #{residual_block_forward.3} parent=55 // pred_region
        %p423 = scmp.lt.s32.totalorder %s24, 1
        %s424 = scalar_select %p423, %s24, 1
        %s425 = smul.addr %s424, 8
        %s426 = scalar_lea.vmem %s4, %s425
      $region64: #{residual_block_forward.3} parent=55 // pred_fallthru
        _
      // Predicated region
      $region65: #{residual_block_forward.3} parent=55 // pred_check
        %p427 = pneg %p176
      $region66: #{residual_block_forward.3} parent=55 // pred_check_branch
        %429 = sbr.rel (%p427) target = $region68
      $region67: #{residual_block_forward.3} parent=55 // pred_region
        %p430 = scmp.lt.s32.totalorder %s24, 1
        %s431 = scalar_select %p430, %s24, 1
        %s432 = smul.addr %s431, 8
        %s433 = scalar_lea.vmem %s5, %s432
      $region68: #{residual_block_forward.3} parent=55 // pred_fallthru
        _
      // Predicated region
      $region69: #{residual_block_forward.3} parent=55 // pred_check
        %p434 = pneg %p202
      $region70: #{residual_block_forward.3} parent=55 // pred_check_branch
        %436 = sbr.rel (%p434) target = $region72
      $region71: #{residual_block_forward.3} parent=55 // pred_region
        %p437 = scmp.lt.s32.totalorder %s24, 1
        %s438 = scalar_select %p437, %s24, 1
        %s439 = smul.addr %s438, 8
        %s440 = scalar_lea.vmem %s6, %s439
      $region72: #{residual_block_forward.3} parent=55 // pred_fallthru
        _
    $region56: #{residual_block_forward.3} parent=5 // pred_fallthru
      _
  $region6: #{residual_block_forward.3} parent=0 // loop_footer
    %s17 = sadd.s32 1, %s13
  $region7: #{residual_block_forward.3} parent=0 // loop_footer_branch
    %12 = sbr.rel target = $region3
  $region8: #{residual_block_forward.3} parent=0 // loop_exit
    _

// kernel: residual_block_forward.4
$region0: #{residual_block_forward.4}
  #allocation0 [shape = 'u32[]', space=smem, size = 0x4, offset = 0x4, fixed_abs, tag = 'smem constant byte address 0x4 - core index']
  #allocation1 [shape = 'u32[72,128]{1,0:T(1,128)}', space=vmem, size = 0x9000, scoped, tag = 'internal scratch']
  %s0 = inlined_call_operand.vmem [shape: f32[2,4,16], index: 0, kind: input, shape index: {}]
  %s1 = inlined_call_operand.vmem [shape: bf16[8,4], index: 1, kind: input, shape index: {}]
  %s2 = inlined_call_operand.vmem [shape: f32[8,1], index: 2, kind: input, shape index: {}]
  %s3 = inlined_call_operand.vmem [shape: f32[8,1], index: 3, kind: input, shape index: {}]
  %s4 = inlined_call_operand.vmem [shape: bf16[8,8], index: 4, kind: input, shape index: {}]
  %s5 = inlined_call_operand.vmem [shape: f32[2,8,1], index: 5, kind: output, shape index: {0}]
  %s6 = inlined_call_operand.vmem [shape: f32[2,8,1], index: 6, kind: output, shape index: {1}]
  %7 = xla_tuple %s5, %s6
  %s8 = sld [smem:[#allocation0]]
  $region65: #{residual_block_forward.4} parent=0
    _
  %s10 = ssub.s32 1, %s8
  %s11 = scalar_select 0, %s10, %s8
  loop: start=0, step=1, limit=4
  $region2: #{residual_block_forward.4} parent=0 // loop_pre_header
    _
  $region3: #{residual_block_forward.4} parent=0 // loop_header
    %s13 = sphi 0, %s17
    %p14 = scmp.ge.s32.totalorder %s13, 4
    %s20 = sphi 0, %s32
    %s21 = sphi 0, %s28
    %s22 = sphi 0, %s20
    %s23 = sphi 0, %s21
    %s24 = sphi 0, %s22
    %s25 = sphi 0, %s23
    %s37 = sphi 0, %s39
    %s40 = sphi 0, %s37
    %s41 = sphi 0, %s40
    %s57 = sphi 0, %s41
    %s61 = sphi 0, %s61
    %s63 = sphi 0, %s61
    %s64 = sphi 0, %s63
    %s78 = sphi 0, %s64
    %s82 = sphi 0, %s82
    %s84 = sphi 0, %s82
    %s85 = sphi 0, %s84
    %s99 = sphi 0, %s85
    %s103 = sphi 0, %s103
    %s105 = sphi 0, %s103
    %s106 = sphi 0, %s105
    %s120 = sphi 0, %s106
    %s124 = sphi 0, %s124
    %s126 = sphi 0, %s124
    %s127 = sphi 0, %s126
    %s141 = sphi 0, %s127
    %s147 = sphi 0, %s149
    %s150 = sphi 0, %s147
    %s151 = sphi 0, %s150
    %s167 = sphi 0, %s151
    %s173 = sphi 0, %s175
    %s176 = sphi 0, %s173
    %s177 = sphi 0, %s176
    %s193 = sphi 0, %s177
  $region4: #{residual_block_forward.4} parent=0 // loop_header_branch
    %16 = sbr.rel (%p14) target = $region8
  $region5: #{residual_block_forward.4} parent=0 // loop_body
    %s18 = ssub.s32 %s13, 1
    %s19 = ssub.s32 %s13, 2
    %s26 = sadd.s32 1, %s21
    %p27 = scmp.ge.s32.totalorder %s26, 1
    %s28 = scalar_select %p27, 0, %s26
    %s29 = sadd.s32 1, %s20
    %s30 = scalar_select %p27, %s29, %s20
    %p31 = scmp.ge.s32.totalorder %s30, 2
    %s32 = scalar_select %p31, 0, %s30
    %s33 = ssub.s32 %s20, %s32
    %s34 = ssub.s32 %s21, %s28
    %s35 = sor.u32 %s33, %s34
    %p36 = scmp.eq.s32.totalorder %s35, 0
    %s38 = sadd.s32 %s37, 1
    %s39 = scalar_select %p36, %s37, %s38
    %p42 = pneg %p36
    %p43 = scmp.eq.s32.totalorder %s13, 1
    %p44 = por %p42, %p43
    %p45 = scmp.ne.s32.totalorder %s37, %s40
    %p46 = scmp.eq.s32.totalorder %s13, 0
    %p47 = por %p45, %p46
    %p48 = scmp.ne.s32.totalorder %s37, %s40
    %p49 = scmp.eq.s32.totalorder %s18, 1
    %p50 = por %p48, %p49
    %p51 = scmp.ne.s32.totalorder %s40, %s41
    %p52 = scmp.eq.s32.totalorder %s18, 0
    %p53 = por %p51, %p52
    %p54 = scmp.ne.s32.totalorder %s40, %s41
    %p55 = scmp.eq.s32.totalorder %s19, 1
    %p56 = por %p54, %p55
    %p58 = scmp.ne.s32.totalorder %s41, %s57
    %p59 = scmp.eq.s32.totalorder %s19, 0
    %p60 = por %p58, %p59
    %s62 = sadd.s32 %s61, 1
    %p65 = scmp.eq.s32.totalorder %s13, 1
    %p66 = scmp.ne.s32.totalorder %s61, %s63
    %p67 = scmp.eq.s32.totalorder %s13, 0
    %p68 = por %p66, %p67
    %p69 = scmp.ne.s32.totalorder %s61, %s63
    %p70 = scmp.eq.s32.totalorder %s18, 1
    %p71 = por %p69, %p70
    %p72 = scmp.ne.s32.totalorder %s63, %s64
    %p73 = scmp.eq.s32.totalorder %s18, 0
    %p74 = por %p72, %p73
    %p75 = scmp.ne.s32.totalorder %s63, %s64
    %p76 = scmp.eq.s32.totalorder %s19, 1
    %p77 = por %p75, %p76
    %p79 = scmp.ne.s32.totalorder %s64, %s78
    %p80 = scmp.eq.s32.totalorder %s19, 0
    %p81 = por %p79, %p80
    %s83 = sadd.s32 %s82, 1
    %p86 = scmp.eq.s32.totalorder %s13, 1
    %p87 = scmp.ne.s32.totalorder %s82, %s84
    %p88 = scmp.eq.s32.totalorder %s13, 0
    %p89 = por %p87, %p88
    %p90 = scmp.ne.s32.totalorder %s82, %s84
    %p91 = scmp.eq.s32.totalorder %s18, 1
    %p92 = por %p90, %p91
    %p93 = scmp.ne.s32.totalorder %s84, %s85
    %p94 = scmp.eq.s32.totalorder %s18, 0
    %p95 = por %p93, %p94
    %p96 = scmp.ne.s32.totalorder %s84, %s85
    %p97 = scmp.eq.s32.totalorder %s19, 1
    %p98 = por %p96, %p97
    %p100 = scmp.ne.s32.totalorder %s85, %s99
    %p101 = scmp.eq.s32.totalorder %s19, 0
    %p102 = por %p100, %p101
    %s104 = sadd.s32 %s103, 1
    %p107 = scmp.eq.s32.totalorder %s13, 1
    %p108 = scmp.ne.s32.totalorder %s103, %s105
    %p109 = scmp.eq.s32.totalorder %s13, 0
    %p110 = por %p108, %p109
    %p111 = scmp.ne.s32.totalorder %s103, %s105
    %p112 = scmp.eq.s32.totalorder %s18, 1
    %p113 = por %p111, %p112
    %p114 = scmp.ne.s32.totalorder %s105, %s106
    %p115 = scmp.eq.s32.totalorder %s18, 0
    %p116 = por %p114, %p115
    %p117 = scmp.ne.s32.totalorder %s105, %s106
    %p118 = scmp.eq.s32.totalorder %s19, 1
    %p119 = por %p117, %p118
    %p121 = scmp.ne.s32.totalorder %s106, %s120
    %p122 = scmp.eq.s32.totalorder %s19, 0
    %p123 = por %p121, %p122
    %s125 = sadd.s32 %s124, 1
    %p128 = scmp.eq.s32.totalorder %s13, 1
    %p129 = scmp.ne.s32.totalorder %s124, %s126
    %p130 = scmp.eq.s32.totalorder %s13, 0
    %p131 = por %p129, %p130
    %p132 = scmp.ne.s32.totalorder %s124, %s126
    %p133 = scmp.eq.s32.totalorder %s18, 1
    %p134 = por %p132, %p133
    %p135 = scmp.ne.s32.totalorder %s126, %s127
    %p136 = scmp.eq.s32.totalorder %s18, 0
    %p137 = por %p135, %p136
    %p138 = scmp.ne.s32.totalorder %s126, %s127
    %p139 = scmp.eq.s32.totalorder %s19, 1
    %p140 = por %p138, %p139
    %p142 = scmp.ne.s32.totalorder %s127, %s141
    %p143 = scmp.eq.s32.totalorder %s19, 0
    %p144 = por %p142, %p143
    %s145 = ssub.s32 %s20, %s32
    %p146 = scmp.eq.s32.totalorder %s145, 0
    %s148 = sadd.s32 %s147, 1
    %s149 = scalar_select %p146, %s147, %s148
    %p152 = pneg %p146
    %p153 = scmp.eq.s32.totalorder %s13, 1
    %p154 = por %p152, %p153
    %p155 = scmp.ne.s32.totalorder %s147, %s150
    %p156 = scmp.eq.s32.totalorder %s13, 0
    %p157 = por %p155, %p156
    %p158 = scmp.ne.s32.totalorder %s147, %s150
    %p159 = scmp.eq.s32.totalorder %s18, 1
    %p160 = por %p158, %p159
    %p161 = scmp.ne.s32.totalorder %s150, %s151
    %p162 = scmp.eq.s32.totalorder %s18, 0
    %p163 = por %p161, %p162
    %p164 = scmp.ne.s32.totalorder %s150, %s151
    %p165 = scmp.eq.s32.totalorder %s19, 1
    %p166 = por %p164, %p165
    %p168 = scmp.ne.s32.totalorder %s151, %s167
    %p169 = scmp.eq.s32.totalorder %s19, 0
    %p170 = por %p168, %p169
    %s171 = ssub.s32 %s20, %s32
    %p172 = scmp.eq.s32.totalorder %s171, 0
    %s174 = sadd.s32 %s173, 1
    %s175 = scalar_select %p172, %s173, %s174
    %p178 = pneg %p172
    %p179 = scmp.eq.s32.totalorder %s13, 1
    %p180 = por %p178, %p179
    %p181 = scmp.ne.s32.totalorder %s173, %s176
    %p182 = scmp.eq.s32.totalorder %s13, 0
    %p183 = por %p181, %p182
    %p184 = scmp.ne.s32.totalorder %s173, %s176
    %p185 = scmp.eq.s32.totalorder %s18, 1
    %p186 = por %p184, %p185
    %p187 = scmp.ne.s32.totalorder %s176, %s177
    %p188 = scmp.eq.s32.totalorder %s18, 0
    %p189 = por %p187, %p188
    %p190 = scmp.ne.s32.totalorder %s176, %s177
    %p191 = scmp.eq.s32.totalorder %s19, 1
    %p192 = por %p190, %p191
    %p194 = scmp.ne.s32.totalorder %s177, %s193
    %p195 = scmp.eq.s32.totalorder %s19, 0
    %p196 = por %p194, %p195
    %p197 = scmp.le.s32.totalorder 1, %s13
    %p198 = scmp.lt.s32.totalorder %s13, 3
    %p199 = pnand %p197, %p198
    %p200 = pneg %p199
    // Predicated region
    $region9: #{residual_block_forward.4} parent=5 // pred_check
      _
    $region10: #{residual_block_forward.4} parent=5 // pred_check_branch
      %202 = sbr.rel (%p199) target = $region12
    $region11: #{residual_block_forward.4} parent=5 // pred_region
      %s203 = ssub.s32 %s13, 1
      // Predicated region
      $region13: #{residual_block_forward.4} parent=11 // pred_check
        %p204 = pneg %p74
      $region14: #{residual_block_forward.4} parent=11 // pred_check_branch
        %206 = sbr.rel (%p204) target = $region16
      $region15: #{residual_block_forward.4} parent=11 // pred_region
        _
      $region16: #{residual_block_forward.4} parent=11 // pred_fallthru
        _
      // Predicated region
      $region17: #{residual_block_forward.4} parent=11 // pred_check
        %p207 = pneg %p95
      $region18: #{residual_block_forward.4} parent=11 // pred_check_branch
        %209 = sbr.rel (%p207) target = $region20
      $region19: #{residual_block_forward.4} parent=11 // pred_region
        _
      $region20: #{residual_block_forward.4} parent=11 // pred_fallthru
        _
      // Predicated region
      $region21: #{residual_block_forward.4} parent=11 // pred_check
        %p210 = pneg %p116
      $region22: #{residual_block_forward.4} parent=11 // pred_check_branch
        %212 = sbr.rel (%p210) target = $region24
      $region23: #{residual_block_forward.4} parent=11 // pred_region
        _
      $region24: #{residual_block_forward.4} parent=11 // pred_fallthru
        _
      // Predicated region
      $region25: #{residual_block_forward.4} parent=11 // pred_check
        %p213 = pneg %p137
      $region26: #{residual_block_forward.4} parent=11 // pred_check_branch
        %215 = sbr.rel (%p213) target = $region28
      $region27: #{residual_block_forward.4} parent=11 // pred_region
        _
      $region28: #{residual_block_forward.4} parent=11 // pred_fallthru
        _
    $region12: #{residual_block_forward.4} parent=5 // pred_fallthru
      _
    %p216 = scmp.lt.s32.totalorder %s13, 2
    // Predicated region
    $region29: #{residual_block_forward.4} parent=5 // pred_check
      %p217 = pneg %p216
    $region30: #{residual_block_forward.4} parent=5 // pred_check_branch
      %219 = sbr.rel (%p217) target = $region32
    $region31: #{residual_block_forward.4} parent=5 // pred_region
      // Predicated region
      $region33: #{residual_block_forward.4} parent=31 // pred_check
        %p220 = pneg %p47
      $region34: #{residual_block_forward.4} parent=31 // pred_check_branch
        %222 = sbr.rel (%p220) target = $region36
      $region35: #{residual_block_forward.4} parent=31 // pred_region
        %p223 = scmp.lt.s32.totalorder %s20, 1
        %s224 = scalar_select %p223, %s20, 1
        %p225 = scmp.lt.s32.totalorder %s21, 0
        %s226 = scalar_select %p225, %s21, 0
        %s227 = sadd.s32 %s226, %s224
        %s228 = smul.addr %s227, 4
        %s229 = scalar_lea.vmem %s0, %s228
      $region36: #{residual_block_forward.4} parent=31 // pred_fallthru
        _
    $region32: #{residual_block_forward.4} parent=5 // pred_fallthru
      _
    %p230 = scmp.le.s32.totalorder 1, %s13
    %p231 = scmp.lt.s32.totalorder %s13, 3
    %p232 = pnand %p230, %p231
    %p233 = pneg %p232
    // Predicated region
    $region37: #{residual_block_forward.4} parent=5 // pred_check
      _
    $region38: #{residual_block_forward.4} parent=5 // pred_check_branch
      %235 = sbr.rel (%p232) target = $region40
    $region39: #{residual_block_forward.4} parent=5 // pred_region
      %s236 = ssub.s32 %s13, 1
      %p237 = scmp.lt.s32.totalorder %s22, 1
      %s238 = scalar_select %p237, %s22, 1
      %p239 = scmp.lt.s32.totalorder %s23, 0
      %s240 = scalar_select %p239, %s23, 0
      %s241 = sadd.s32 %s240, %s238
      %s242 = smul.addr %s241, 4
      %s243 = scalar_lea.vmem %s0, %s242
      %p244 = pneg %p53
      %p245 = pneg %p50
      %p246 = pneg %p74
      %p247 = pneg %p71
      %p248 = pneg %p95
      %p249 = pneg %p92
      %p250 = pneg %p116
      %p251 = pneg %p113
      %p252 = pneg %p137
      %p253 = pneg %p134
      %p254 = pneg %p163
      %p255 = pneg %p160
      %p256 = scmp.lt.s32.totalorder %s22, 1
      %s257 = scalar_select %p256, %s22, 1
      %s258 = smul.addr %s257, 8
      %s259 = scalar_lea.vmem %s5, %s258
      %p260 = pneg %p189
      %p261 = pneg %p186
      %p262 = scmp.lt.s32.totalorder %s22, 1
      %s263 = scalar_select %p262, %s22, 1
      %s264 = smul.addr %s263, 8
      %s265 = scalar_lea.vmem %s6, %s264
      %p266 = scmp.lt.s32.totalorder %s22, 1
      %s267 = scalar_select %p266, %s22, 1
      %p268 = scmp.lt.s32.totalorder %s23, 0
      %s269 = scalar_select %p268, %s23, 0
      %s270 = sadd.s32 %s269, %s267
      %s271 = smul.addr %s270, 4
      %s272 = scalar_lea.vmem %s0, %s271
      %p273 = scmp.lt.s32.totalorder %s22, 1
      %s274 = scalar_select %p273, %s22, 1
      %s275 = smul.addr %s274, 8
      %s276 = scalar_lea.vmem %s5, %s275
      %p277 = scmp.lt.s32.totalorder %s22, 1
      %s278 = scalar_select %p277, %s22, 1
      %s279 = smul.addr %s278, 8
      %s280 = scalar_lea.vmem %s6, %s279
      %p282 = scmp.eq.s32.totalorder %s23, 0
      // Predicated region
      $region41: #{residual_block_forward.4} parent=39 // pred_check
        %p283 = pneg %p282
      $region42: #{residual_block_forward.4} parent=39 // pred_check_branch
        %285 = sbr.rel (%p283) target = $region44
      $region43: #{residual_block_forward.4} parent=39 // pred_region
        %vm286 = vcmask 7168
        %287 = vst.msk [vmem:[%s276] sm:$0xff] %vm286, 0.0
        %288 = vst.msk [vmem:[%s280] sm:$0xff] %vm286, 0.0
      $region44: #{residual_block_forward.4} parent=39 // pred_fallthru
        _
      %v289 = vld [vmem:[%s272] sm:$0xf]
      %v290 = vpack.c.bf16 %v289, %v289
      %v291 = vld [vmem:[%s1] sm:$0xf]
      %vm292 = vcmask 31744
      %v294 = vsel %vm292, %v291, 0
      %vm296 = vcmask 1041408
      %v298 = vsel %vm296, %v290, 0
      %300 = vmatpush.bf16.msra.mxu0 0
      %301 = vmatpush.bf16.msra.mxu0 0
      %302 = vmatpush.bf16.msra.mxu0 0
      %303 = vmatpush.bf16.msra.mxu0 0
      %304 = vmatpush.bf16.msra.mxu0 0
      %305 = vmatpush.bf16.msra.mxu0 0
      %306 = vmatpush.bf16.msra.mxu0 0
      %307 = vmatpush.bf16.msra.mxu0 %v298
      %308 = vmatmul.bf16.gmra.mxu0 %v294
      %v309 = vpop.f32.mrf.mxu0
      %v310 = vadd.f32 0.0, %v309
      %v311 = vpop.f32.mrf.mxu0
      %312 = vdwg.mxu0
      %v313 = vld [vmem:[%s2] sm:$0xff]
      %315 = vset.pattern.permute.xlu0 0
      %316 = vperm.xlu0 %315, %v313
      %v317 = vpop.permute.xlu0 %316
      %v319 = vmul.f32 %v310, %v317
      %v320 = vld [vmem:[%s3] sm:$0xff]
      %322 = vset.pattern.permute.xlu0 0
      %323 = vperm.xlu0 %322, %v320
      %v324 = vpop.permute.xlu0 %323
      %v326 = vadd.f32 %v319, %v324
      %v327 = vmax.f32 %v326, 0.0
      %v328 = vld [vmem:[%s4] sm:$0xf]
      %v329 = vpack.c.bf16 %v327, %v327
      %vm330 = vcmask 64512
      %v332 = vsel %vm330, %v328, 0
      %vm334 = vcmask 1043456
      %v336 = vsel %vm334, %v329, 0
      %338 = vmatpush.bf16.msra.mxu0 0
      %339 = vmatpush.bf16.msra.mxu0 0
      %340 = vmatpush.bf16.msra.mxu0 0
      %341 = vmatpush.bf16.msra.mxu0 0
      %342 = vmatpush.bf16.msra.mxu0 0
      %343 = vmatpush.bf16.msra.mxu0 0
      %344 = vmatpush.bf16.msra.mxu0 0
      %345 = vmatpush.bf16.msra.mxu0 %v336
      %346 = vmatmul.bf16.gmra.mxu0 %v332
      %v347 = vpop.f32.mrf.mxu0
      %v348 = vadd.f32 0.0, %v347
      %v349 = vpop.f32.mrf.mxu0
      %350 = vdwg.mxu0
      %v351 = vld [vmem:[%s276] sm:$0xff]
      %vm352 = vcmask 130048
      %v353 = vsel %vm352, %v348, 0.0
      %354 = vadd.xlane.f32.xlu0 %v353
      %v355 = vpop.xlane.xlu0 %354
      %v356 = vadd.f32 %v351, %v355
      %vm357 = vcmask 7168
      %358 = vst.msk [vmem:[%s276] sm:$0xff] %vm357, %v356
      %v359 = vld [vmem:[%s280] sm:$0xff]
      %v360 = vmul.f32 %v348, %v348
      %v361 = vsel %vm352, %v360, 0.0
      %362 = vadd.xlane.f32.xlu0 %v361
      %v363 = vpop.xlane.xlu0 %362
      %v364 = vadd.f32 %v359, %v363
      %365 = vst.msk [vmem:[%s280] sm:$0xff] %vm357, %v364
      %p366 = scmp.lt.s32.totalorder %s22, 1
      %s367 = scalar_select %p366, %s22, 1
      %s368 = smul.addr %s367, 8
      %s369 = scalar_lea.vmem %s5, %s368
      %p370 = scmp.lt.s32.totalorder %s22, 1
      %s371 = scalar_select %p370, %s22, 1
      %s372 = smul.addr %s371, 8
      %s373 = scalar_lea.vmem %s6, %s372
      // Predicated region
      $region45: #{residual_block_forward.4} parent=39 // pred_check
        %p374 = pneg %p160
      $region46: #{residual_block_forward.4} parent=39 // pred_check_branch
        %376 = sbr.rel (%p374) target = $region48
      $region47: #{residual_block_forward.4} parent=39 // pred_region
        _
      $region48: #{residual_block_forward.4} parent=39 // pred_fallthru
        _
      // Predicated region
      $region49: #{residual_block_forward.4} parent=39 // pred_check
        %p377 = pneg %p186
      $region50: #{residual_block_forward.4} parent=39 // pred_check_branch
        %379 = sbr.rel (%p377) target = $region52
      $region51: #{residual_block_forward.4} parent=39 // pred_region
        _
      $region52: #{residual_block_forward.4} parent=39 // pred_fallthru
        _
    $region40: #{residual_block_forward.4} parent=5 // pred_fallthru
      _
    %p380 = scmp.le.s32.totalorder 2, %s13
    // Predicated region
    $region53: #{residual_block_forward.4} parent=5 // pred_check
      %p381 = pneg %p380
    $region54: #{residual_block_forward.4} parent=5 // pred_check_branch
      %383 = sbr.rel (%p381) target = $region56
    $region55: #{residual_block_forward.4} parent=5 // pred_region
      %s384 = ssub.s32 %s13, 2
      // Predicated region
      $region57: #{residual_block_forward.4} parent=55 // pred_check
        %p385 = pneg %p166
      $region58: #{residual_block_forward.4} parent=55 // pred_check_branch
        %387 = sbr.rel (%p385) target = $region60
      $region59: #{residual_block_forward.4} parent=55 // pred_region
        %p388 = scmp.lt.s32.totalorder %s24, 1
        %s389 = scalar_select %p388, %s24, 1
        %s390 = smul.addr %s389, 8
        %s391 = scalar_lea.vmem %s5, %s390
      $region60: #{residual_block_forward.4} parent=55 // pred_fallthru
        _
      // Predicated region
      $region61: #{residual_block_forward.4} parent=55 // pred_check
        %p392 = pneg %p192
      $region62: #{residual_block_forward.4} parent=55 // pred_check_branch
        %394 = sbr.rel (%p392) target = $region64
      $region63: #{residual_block_forward.4} parent=55 // pred_region
        %p395 = scmp.lt.s32.totalorder %s24, 1
        %s396 = scalar_select %p395, %s24, 1
        %s397 = smul.addr %s396, 8
        %s398 = scalar_lea.vmem %s6, %s397
      $region64: #{residual_block_forward.4} parent=55 // pred_fallthru
        _
    $region56: #{residual_block_forward.4} parent=5 // pred_fallthru
      _
  $region6: #{residual_block_forward.4} parent=0 // loop_footer
    %s17 = sadd.s32 1, %s13
  $region7: #{residual_block_forward.4} parent=0 // loop_footer_branch
    %12 = sbr.rel target = $region3
  $region8: #{residual_block_forward.4} parent=0 // loop_exit
    _

// kernel: residual_block_forward.5
$region0: #{residual_block_forward.5}
  #allocation0 [shape = 'u32[]', space=smem, size = 0x4, offset = 0x4, fixed_abs, tag = 'smem constant byte address 0x4 - core index']
  #allocation1 [shape = 'u32[72,128]{1,0:T(1,128)}', space=vmem, size = 0x9000, scoped, tag = 'internal scratch']
  %s0 = inlined_call_operand.vmem [shape: f32[2,4,16], index: 0, kind: input, shape index: {}]
  %s1 = inlined_call_operand.vmem [shape: bf16[8,4], index: 1, kind: input, shape index: {}]
  %s2 = inlined_call_operand.vmem [shape: f32[8,1], index: 2, kind: input, shape index: {}]
  %s3 = inlined_call_operand.vmem [shape: f32[8,1], index: 3, kind: input, shape index: {}]
  %s4 = inlined_call_operand.vmem [shape: bf16[8,8], index: 4, kind: input, shape index: {}]
  %s5 = inlined_call_operand.vmem [shape: f32[8,1], index: 5, kind: input, shape index: {}]
  %s6 = inlined_call_operand.vmem [shape: f32[8,1], index: 6, kind: input, shape index: {}]
  %s7 = inlined_call_operand.vmem [shape: bf16[8,4], index: 7, kind: input, shape index: {}]
  %s8 = inlined_call_operand.vmem [shape: f32[8,1], index: 8, kind: input, shape index: {}]
  %s9 = inlined_call_operand.vmem [shape: f32[8,1], index: 9, kind: input, shape index: {}]
  %s10 = inlined_call_operand.hbm [shape: f32[2,8,16], index: 10, kind: output, shape index: {}]
  %s11 = sld [smem:[#allocation0]]
  $region73: #{residual_block_forward.5} parent=0
    _
  %s13 = ssub.s32 1, %s11
  %s14 = scalar_select 0, %s13, %s11
  $region1: #{residual_block_forward.5} parent=0
    #allocation2 [shape = 'u8[8192]{0}', space=vmem, size = 0x2000, scoped, tag = 'output window, operand 0']
    #allocation3 [shape = 's32[2]{0}', space=sflag, size = 0x8, scoped, tag = 'scoped memory for residual_block_forward.5']
    %15 = vsyncpa [#allocation3], 0
    %s16 = scalar_lea.sflag [#allocation3], 1
    %17 = vsyncpa %s16, 0
    loop: start=0, step=1, limit=4
    $region2: #{residual_block_forward.5} parent=1 // loop_pre_header
      _
    $region3: #{residual_block_forward.5} parent=1 // loop_header
      %s19 = sphi 0, %s23
      %p20 = scmp.ge.s32.totalorder %s19, 4
      %s26 = sphi 0, %s38
      %s27 = sphi 0, %s34
      %s28 = sphi 0, %s26
      %s29 = sphi 0, %s27
      %s30 = sphi 0, %s28
      %s31 = sphi 0, %s29
      %s43 = sphi 0, %s45
      %s46 = sphi 0, %s43
      %s47 = sphi 0, %s46
      %s63 = sphi 0, %s47
      %s67 = sphi 0, %s67
      %s69 = sphi 0, %s67
      %s70 = sphi 0, %s69
      %s84 = sphi 0, %s70
      %s88 = sphi 0, %s88
      %s90 = sphi 0, %s88
      %s91 = sphi 0, %s90
      %s105 = sphi 0, %s91
      %s109 = sphi 0, %s109
      %s111 = sphi 0, %s109
      %s112 = sphi 0, %s111
      %s126 = sphi 0, %s112
      %s130 = sphi 0, %s130
      %s132 = sphi 0, %s130
      %s133 = sphi 0, %s132
      %s147 = sphi 0, %s133
      %s151 = sphi 0, %s151
      %s153 = sphi 0, %s151
      %s154 = sphi 0, %s153
      %s168 = sphi 0, %s154
      %s172 = sphi 0, %s172
      %s174 = sphi 0, %s172
      %s175 = sphi 0, %s174
      %s189 = sphi 0, %s175
      %s193 = sphi 0, %s193
      %s195 = sphi 0, %s193
      %s196 = sphi 0, %s195
      %s210 = sphi 0, %s196
      %s214 = sphi 0, %s214
      %s216 = sphi 0, %s214
      %s217 = sphi 0, %s216
      %s231 = sphi 0, %s217
      %s235 = sphi 0, %s235
      %s237 = sphi 0, %s235
      %s238 = sphi 0, %s237
      %s252 = sphi 0, %s238
      %s260 = sphi 0, %s262
      %s263 = sphi 0, %s260
      %s264 = sphi 0, %s263
      %s280 = sphi 0, %s264
    $region4: #{residual_block_forward.5} parent=1 // loop_header_branch
      %22 = sbr.rel (%p20) target = $region8
    $region5: #{residual_block_forward.5} parent=1 // loop_body
      %s24 = ssub.s32 %s19, 1
      %s25 = ssub.s32 %s19, 2
      %s32 = sadd.s32 1, %s27
      %p33 = scmp.ge.s32.totalorder %s32, 1
      %s34 = scalar_select %p33, 0, %s32
      %s35 = sadd.s32 1, %s26
      %s36 = scalar_select %p33, %s35, %s26
      %p37 = scmp.ge.s32.totalorder %s36, 2
      %s38 = scalar_select %p37, 0, %s36
      %s39 = ssub.s32 %s26, %s38
      %s40 = ssub.s32 %s27, %s34
      %s41 = sor.u32 %s39, %s40
      %p42 = scmp.eq.s32.totalorder %s41, 0
      %s44 = sadd.s32 %s43, 1
      %s45 = scalar_select %p42, %s43, %s44
      %p48 = pneg %p42
      %p49 = scmp.eq.s32.totalorder %s19, 1
      %p50 = por %p48, %p49
      %p51 = scmp.ne.s32.totalorder %s43, %s46
      %p52 = scmp.eq.s32.totalorder %s19, 0
      %p53 = por %p51, %p52
      %p54 = scmp.ne.s32.totalorder %s43, %s46
      %p55 = scmp.eq.s32.totalorder %s24, 1
      %p56 = por %p54, %p55
      %p57 = scmp.ne.s32.totalorder %s46, %s47
      %p58 = scmp.eq.s32.totalorder %s24, 0
      %p59 = por %p57, %p58
      %p60 = scmp.ne.s32.totalorder %s46, %s47
      %p61 = scmp.eq.s32.totalorder %s25, 1
      %p62 = por %p60, %p61
      %p64 = scmp.ne.s32.totalorder %s47, %s63
      %p65 = scmp.eq.s32.totalorder %s25, 0
      %p66 = por %p64, %p65
      %s68 = sadd.s32 %s67, 1
      %p71 = scmp.eq.s32.totalorder %s19, 1
      %p72 = scmp.ne.s32.totalorder %s67, %s69
      %p73 = scmp.eq.s32.totalorder %s19, 0
      %p74 = por %p72, %p73
      %p75 = scmp.ne.s32.totalorder %s67, %s69
      %p76 = scmp.eq.s32.totalorder %s24, 1
      %p77 = por %p75, %p76
      %p78 = scmp.ne.s32.totalorder %s69, %s70
      %p79 = scmp.eq.s32.totalorder %s24, 0
      %p80 = por %p78, %p79
      %p81 = scmp.ne.s32.totalorder %s69, %s70
      %p82 = scmp.eq.s32.totalorder %s25, 1
      %p83 = por %p81, %p82
      %p85 = scmp.ne.s32.totalorder %s70, %s84
      %p86 = scmp.eq.s32.totalorder %s25, 0
      %p87 = por %p85, %p86
      %s89 = sadd.s32 %s88, 1
      %p92 = scmp.eq.s32.totalorder %s19, 1
      %p93 = scmp.ne.s32.totalorder %s88, %s90
      %p94 = scmp.eq.s32.totalorder %s19, 0
      %p95 = por %p93, %p94
      %p96 = scmp.ne.s32.totalorder %s88, %s90
      %p97 = scmp.eq.s32.totalorder %s24, 1
      %p98 = por %p96, %p97
      %p99 = scmp.ne.s32.totalorder %s90, %s91
      %p100 = scmp.eq.s32.totalorder %s24, 0
      %p101 = por %p99, %p100
      %p102 = scmp.ne.s32.totalorder %s90, %s91
      %p103 = scmp.eq.s32.totalorder %s25, 1
      %p104 = por %p102, %p103
      %p106 = scmp.ne.s32.totalorder %s91, %s105
      %p107 = scmp.eq.s32.totalorder %s25, 0
      %p108 = por %p106, %p107
      %s110 = sadd.s32 %s109, 1
      %p113 = scmp.eq.s32.totalorder %s19, 1
      %p114 = scmp.ne.s32.totalorder %s109, %s111
      %p115 = scmp.eq.s32.totalorder %s19, 0
      %p116 = por %p114, %p115
      %p117 = scmp.ne.s32.totalorder %s109, %s111
      %p118 = scmp.eq.s32.totalorder %s24, 1
      %p119 = por %p117, %p118
      %p120 = scmp.ne.s32.totalorder %s111, %s112
      %p121 = scmp.eq.s32.totalorder %s24, 0
      %p122 = por %p120, %p121
      %p123 = scmp.ne.s32.totalorder %s111, %s112
      %p124 = scmp.eq.s32.totalorder %s25, 1
      %p125 = por %p123, %p124
      %p127 = scmp.ne.s32.totalorder %s112, %s126
      %p128 = scmp.eq.s32.totalorder %s25, 0
      %p129 = por %p127, %p128
      %s131 = sadd.s32 %s130, 1
      %p134 = scmp.eq.s32.totalorder %s19, 1
      %p135 = scmp.ne.s32.totalorder %s130, %s132
      %p136 = scmp.eq.s32.totalorder %s19, 0
      %p137 = por %p135, %p136
      %p138 = scmp.ne.s32.totalorder %s130, %s132
      %p139 = scmp.eq.s32.totalorder %s24, 1
      %p140 = por %p138, %p139
      %p141 = scmp.ne.s32.totalorder %s132, %s133
      %p142 = scmp.eq.s32.totalorder %s24, 0
      %p143 = por %p141, %p142
      %p144 = scmp.ne.s32.totalorder %s132, %s133
      %p145 = scmp.eq.s32.totalorder %s25, 1
      %p146 = por %p144, %p145
      %p148 = scmp.ne.s32.totalorder %s133, %s147
      %p149 = scmp.eq.s32.totalorder %s25, 0
      %p150 = por %p148, %p149
      %s152 = sadd.s32 %s151, 1
      %p155 = scmp.eq.s32.totalorder %s19, 1
      %p156 = scmp.ne.s32.totalorder %s151, %s153
      %p157 = scmp.eq.s32.totalorder %s19, 0
      %p158 = por %p156, %p157
      %p159 = scmp.ne.s32.totalorder %s151, %s153
      %p160 = scmp.eq.s32.totalorder %s24, 1
      %p161 = por %p159, %p160
      %p162 = scmp.ne.s32.totalorder %s153, %s154
      %p163 = scmp.eq.s32.totalorder %s24, 0
      %p164 = por %p162, %p163
      %p165 = scmp.ne.s32.totalorder %s153, %s154
      %p166 = scmp.eq.s32.totalorder %s25, 1
      %p167 = por %p165, %p166
      %p169 = scmp.ne.s32.totalorder %s154, %s168
      %p170 = scmp.eq.s32.totalorder %s25, 0
      %p171 = por %p169, %p170
      %s173 = sadd.s32 %s172, 1
      %p176 = scmp.eq.s32.totalorder %s19, 1
      %p177 = scmp.ne.s32.totalorder %s172, %s174
      %p178 = scmp.eq.s32.totalorder %s19, 0
      %p179 = por %p177, %p178
      %p180 = scmp.ne.s32.totalorder %s172, %s174
      %p181 = scmp.eq.s32.totalorder %s24, 1
      %p182 = por %p180, %p181
      %p183 = scmp.ne.s32.totalorder %s174, %s175
      %p184 = scmp.eq.s32.totalorder %s24, 0
      %p185 = por %p183, %p184
      %p186 = scmp.ne.s32.totalorder %s174, %s175
      %p187 = scmp.eq.s32.totalorder %s25, 1
      %p188 = por %p186, %p187
      %p190 = scmp.ne.s32.totalorder %s175, %s189
      %p191 = scmp.eq.s32.totalorder %s25, 0
      %p192 = por %p190, %p191
      %s194 = sadd.s32 %s193, 1
      %p197 = scmp.eq.s32.totalorder %s19, 1
      %p198 = scmp.ne.s32.totalorder %s193, %s195
      %p199 = scmp.eq.s32.totalorder %s19, 0
      %p200 = por %p198, %p199
      %p201 = scmp.ne.s32.totalorder %s193, %s195
      %p202 = scmp.eq.s32.totalorder %s24, 1
      %p203 = por %p201, %p202
      %p204 = scmp.ne.s32.totalorder %s195, %s196
      %p205 = scmp.eq.s32.totalorder %s24, 0
      %p206 = por %p204, %p205
      %p207 = scmp.ne.s32.totalorder %s195, %s196
      %p208 = scmp.eq.s32.totalorder %s25, 1
      %p209 = por %p207, %p208
      %p211 = scmp.ne.s32.totalorder %s196, %s210
      %p212 = scmp.eq.s32.totalorder %s25, 0
      %p213 = por %p211, %p212
      %s215 = sadd.s32 %s214, 1
      %p218 = scmp.eq.s32.totalorder %s19, 1
      %p219 = scmp.ne.s32.totalorder %s214, %s216
      %p220 = scmp.eq.s32.totalorder %s19, 0
      %p221 = por %p219, %p220
      %p222 = scmp.ne.s32.totalorder %s214, %s216
      %p223 = scmp.eq.s32.totalorder %s24, 1
      %p224 = por %p222, %p223
      %p225 = scmp.ne.s32.totalorder %s216, %s217
      %p226 = scmp.eq.s32.totalorder %s24, 0
      %p227 = por %p225, %p226
      %p228 = scmp.ne.s32.totalorder %s216, %s217
      %p229 = scmp.eq.s32.totalorder %s25, 1
      %p230 = por %p228, %p229
      %p232 = scmp.ne.s32.totalorder %s217, %s231
      %p233 = scmp.eq.s32.totalorder %s25, 0
      %p234 = por %p232, %p233
      %s236 = sadd.s32 %s235, 1
      %p239 = scmp.eq.s32.totalorder %s19, 1
      %p240 = scmp.ne.s32.totalorder %s235, %s237
      %p241 = scmp.eq.s32.totalorder %s19, 0
      %p242 = por %p240, %p241
      %p243 = scmp.ne.s32.totalorder %s235, %s237
      %p244 = scmp.eq.s32.totalorder %s24, 1
      %p245 = por %p243, %p244
      %p246 = scmp.ne.s32.totalorder %s237, %s238
      %p247 = scmp.eq.s32.totalorder %s24, 0
      %p248 = por %p246, %p247
      %p249 = scmp.ne.s32.totalorder %s237, %s238
      %p250 = scmp.eq.s32.totalorder %s25, 1
      %p251 = por %p249, %p250
      %p253 = scmp.ne.s32.totalorder %s238, %s252
      %p254 = scmp.eq.s32.totalorder %s25, 0
      %p255 = por %p253, %p254
      %s256 = ssub.s32 %s26, %s38
      %s257 = ssub.s32 %s27, %s34
      %s258 = sor.u32 %s256, %s257
      %p259 = scmp.eq.s32.totalorder %s258, 0
      %s261 = sadd.s32 %s260, 1
      %s262 = scalar_select %p259, %s260, %s261
      %p265 = pneg %p259
      %p266 = scmp.eq.s32.totalorder %s19, 1
      %p267 = por %p265, %p266
      %p268 = scmp.ne.s32.totalorder %s260, %s263
      %p269 = scmp.eq.s32.totalorder %s19, 0
      %p270 = por %p268, %p269
      %p271 = scmp.ne.s32.totalorder %s260, %s263
      %p272 = scmp.eq.s32.totalorder %s24, 1
      %p273 = por %p271, %p272
      %p274 = scmp.ne.s32.totalorder %s263, %s264
      %p275 = scmp.eq.s32.totalorder %s24, 0
      %p276 = por %p274, %p275
      %p277 = scmp.ne.s32.totalorder %s263, %s264
      %p278 = scmp.eq.s32.totalorder %s25, 1
      %p279 = por %p277, %p278
      %p281 = scmp.ne.s32.totalorder %s264, %s280
      %p282 = scmp.eq.s32.totalorder %s25, 0
      %p283 = por %p281, %p282
      %p284 = scmp.le.s32.totalorder 1, %s19
      %p285 = scmp.lt.s32.totalorder %s19, 3
      %p286 = pnand %p284, %p285
      %p287 = pneg %p286
      // Predicated region
      $region9: #{residual_block_forward.5} parent=5 // pred_check
        _
      $region10: #{residual_block_forward.5} parent=5 // pred_check_branch
        %289 = sbr.rel (%p286) target = $region12
      $region11: #{residual_block_forward.5} parent=5 // pred_region
        %s290 = ssub.s32 %s19, 1
        // Predicated region
        $region13: #{residual_block_forward.5} parent=11 // pred_check
          %p291 = pneg %p80
        $region14: #{residual_block_forward.5} parent=11 // pred_check_branch
          %293 = sbr.rel (%p291) target = $region16
        $region15: #{residual_block_forward.5} parent=11 // pred_region
          _
        $region16: #{residual_block_forward.5} parent=11 // pred_fallthru
          _
        // Predicated region
        $region17: #{residual_block_forward.5} parent=11 // pred_check
          %p294 = pneg %p101
        $region18: #{residual_block_forward.5} parent=11 // pred_check_branch
          %296 = sbr.rel (%p294) target = $region20
        $region19: #{residual_block_forward.5} parent=11 // pred_region
          _
        $region20: #{residual_block_forward.5} parent=11 // pred_fallthru
          _
        // Predicated region
        $region21: #{residual_block_forward.5} parent=11 // pred_check
          %p297 = pneg %p122
        $region22: #{residual_block_forward.5} parent=11 // pred_check_branch
          %299 = sbr.rel (%p297) target = $region24
        $region23: #{residual_block_forward.5} parent=11 // pred_region
          _
        $region24: #{residual_block_forward.5} parent=11 // pred_fallthru
          _
        // Predicated region
        $region25: #{residual_block_forward.5} parent=11 // pred_check
          %p300 = pneg %p143
        $region26: #{residual_block_forward.5} parent=11 // pred_check_branch
          %302 = sbr.rel (%p300) target = $region28
        $region27: #{residual_block_forward.5} parent=11 // pred_region
          _
        $region28: #{residual_block_forward.5} parent=11 // pred_fallthru
          _
        // Predicated region
        $region29: #{residual_block_forward.5} parent=11 // pred_check
          %p303 = pneg %p164
        $region30: #{residual_block_forward.5} parent=11 // pred_check_branch
          %305 = sbr.rel (%p303) target = $region32
        $region31: #{residual_block_forward.5} parent=11 // pred_region
          _
        $region32: #{residual_block_forward.5} parent=11 // pred_fallthru
          _
        // Predicated region
        $region33: #{residual_block_forward.5} parent=11 // pred_check
          %p306 = pneg %p185
        $region34: #{residual_block_forward.5} parent=11 // pred_check_branch
          %308 = sbr.rel (%p306) target = $region36
        $region35: #{residual_block_forward.5} parent=11 // pred_region
          _
        $region36: #{residual_block_forward.5} parent=11 // pred_fallthru
          _
        // Predicated region
        $region37: #{residual_block_forward.5} parent=11 // pred_check
          %p309 = pneg %p206
        $region38: #{residual_block_forward.5} parent=11 // pred_check_branch
          %311 = sbr.rel (%p309) target = $region40
        $region39: #{residual_block_forward.5} parent=11 // pred_region
          _
        $region40: #{residual_block_forward.5} parent=11 // pred_fallthru
          _
        // Predicated region
        $region41: #{residual_block_forward.5} parent=11 // pred_check
          %p312 = pneg %p227
        $region42: #{residual_block_forward.5} parent=11 // pred_check_branch
          %314 = sbr.rel (%p312) target = $region44
        $region43: #{residual_block_forward.5} parent=11 // pred_region
          _
        $region44: #{residual_block_forward.5} parent=11 // pred_fallthru
          _
        // Predicated region
        $region45: #{residual_block_forward.5} parent=11 // pred_check
          %p315 = pneg %p248
        $region46: #{residual_block_forward.5} parent=11 // pred_check_branch
          %317 = sbr.rel (%p315) target = $region48
        $region47: #{residual_block_forward.5} parent=11 // pred_region
          _
        $region48: #{residual_block_forward.5} parent=11 // pred_fallthru
          _
      $region12: #{residual_block_forward.5} parent=5 // pred_fallthru
        _
      %p318 = scmp.lt.s32.totalorder %s19, 2
      // Predicated region
      $region49: #{residual_block_forward.5} parent=5 // pred_check
        %p319 = pneg %p318
      $region50: #{residual_block_forward.5} parent=5 // pred_check_branch
        %321 = sbr.rel (%p319) target = $region52
      $region51: #{residual_block_forward.5} parent=5 // pred_region
        // Predicated region
        $region53: #{residual_block_forward.5} parent=51 // pred_check
          %p322 = pneg %p53
        $region54: #{residual_block_forward.5} parent=51 // pred_check_branch
          %324 = sbr.rel (%p322) target = $region56
        $region55: #{residual_block_forward.5} parent=51 // pred_region
          %p325 = scmp.lt.s32.totalorder %s26, 1
          %s326 = scalar_select %p325, %s26, 1
          %p327 = scmp.lt.s32.totalorder %s27, 0
          %s328 = scalar_select %p327, %s27, 0
          %s329 = sadd.s32 %s328, %s326
          %s330 = smul.addr %s329, 4
          %s331 = scalar_lea.vmem %s0, %s330
        $region56: #{residual_block_forward.5} parent=51 // pred_fallthru
          _
      $region52: #{residual_block_forward.5} parent=5 // pred_fallthru
        _
      %p332 = scmp.le.s32.totalorder 1, %s19
      %p333 = scmp.lt.s32.totalorder %s19, 3
      %p334 = pnand %p332, %p333
      %p335 = pneg %p334
      // Predicated region
      $region57: #{residual_block_forward.5} parent=5 // pred_check
        _
      $region58: #{residual_block_forward.5} parent=5 // pred_check_branch
        %337 = sbr.rel (%p334) target = $region60
      $region59: #{residual_block_forward.5} parent=5 // pred_region
        %s338 = ssub.s32 %s19, 1
        %p339 = scmp.lt.s32.totalorder %s28, 1
        %s340 = scalar_select %p339, %s28, 1
        %p341 = scmp.lt.s32.totalorder %s29, 0
        %s342 = scalar_select %p341, %s29, 0
        %s343 = sadd.s32 %s342, %s340
        %s344 = smul.addr %s343, 4
        %s345 = scalar_lea.vmem %s0, %s344
        %p346 = pneg %p59
        %p347 = pneg %p56
        %p348 = pneg %p80
        %p349 = pneg %p77
        %p350 = pneg %p101
        %p351 = pneg %p98
        %p352 = pneg %p122
        %p353 = pneg %p119
        %p354 = pneg %p143
        %p355 = pneg %p140
        %p356 = pneg %p164
        %p357 = pneg %p161
        %p358 = pneg %p185
        %p359 = pneg %p182
        %p360 = pneg %p206
        %p361 = pneg %p203
        %p362 = pneg %p227
        %p363 = pneg %p224
        %p364 = pneg %p248
        %p365 = pneg %p245
        %p366 = pneg %p276
        %p367 = pneg %p273
        %s368 = sand.u32 %s263, 1
        %s369 = scalar_lea.sflag [#allocation3], %s368
        %s370 = sand.u32 %s263, 1
        %s371 = smul.addr %s370, 8
        %s372 = scalar_lea.vmem [#allocation2], %s371
        %p373 = scmp.lt.s32.totalorder %s28, 1
        %s374 = scalar_select %p373, %s28, 1
        %p375 = scmp.lt.s32.totalorder %s29, 0
        %s376 = scalar_select %p375, %s29, 0
        %s377 = sadd.s32 %s376, %s374
        %s378 = smul.addr %s377, 4
        %s379 = scalar_lea.vmem %s0, %s378
        %v381 = vld [vmem:[%s379] sm:$0xf]
        %v382 = vpack.c.bf16 %v381, %v381
        %v383 = vld [vmem:[%s7] sm:$0xf]
        %vm384 = vcmask 31744
        %v386 = vsel %vm384, %v383, 0
        %vm388 = vcmask 1041408
        %v390 = vsel %vm388, %v382, 0
        %392 = vmatpush.bf16.msra.mxu0 0
        %393 = vmatpush.bf16.msra.mxu0 0
        %394 = vmatpush.bf16.msra.mxu0 0
        %395 = vmatpush.bf16.msra.mxu0 0
        %396 = vmatpush.bf16.msra.mxu0 0
        %397 = vmatpush.bf16.msra.mxu0 0
        %398 = vmatpush.bf16.msra.mxu0 0
        %399 = vmatpush.bf16.msra.mxu0 %v390
        %400 = vmatmul.bf16.gmra.mxu0 %v386
        %v401 = vpop.f32.mrf.mxu0
        %v402 = vadd.f32 0.0, %v401
        %v403 = vpop.f32.mrf.mxu0
        %404 = vdwg.mxu0
        %v405 = vld [vmem:[%s8] sm:$0xff]
        %407 = vset.pattern.permute.xlu0 0
        %408 = vperm.xlu0 %407, %v405
        %v409 = vpop.permute.xlu0 %408
        %v411 = vmul.f32 %v402, %v409
        %v412 = vld [vmem:[%s9] sm:$0xff]
        %414 = vset.pattern.permute.xlu0 0
        %415 = vperm.xlu0 %414, %v412
        %v416 = vpop.permute.xlu0 %415
        %v418 = vadd.f32 %v411, %v416
        %v419 = vld [vmem:[%s1] sm:$0xf]
        %v421 = vsel %vm384, %v419, 0
        %423 = vmatpush.bf16.msra.mxu0 0
        %424 = vmatpush.bf16.msra.mxu0 0
        %425 = vmatpush.bf16.msra.mxu0 0
        %426 = vmatpush.bf16.msra.mxu0 0
        %427 = vmatpush.bf16.msra.mxu0 0
        %428 = vmatpush.bf16.msra.mxu0 0
        %429 = vmatpush.bf16.msra.mxu0 0
        %430 = vmatpush.bf16.msra.mxu0 %v390
        %431 = vmatmul.bf16.gmra.mxu0 %v421
        %v432 = vpop.f32.mrf.mxu0
        %v433 = vadd.f32 0.0, %v432
        %v434 = vpop.f32.mrf.mxu0
        %435 = vdwg.mxu0
        %v436 = vld [vmem:[%s2] sm:$0xff]
        %438 = vset.pattern.permute.xlu0 0
        %439 = vperm.xlu0 %438, %v436
        %v440 = vpop.permute.xlu0 %439
        %v442 = vmul.f32 %v433, %v440
        %v443 = vld [vmem:[%s3] sm:$0xff]
        %445 = vset.pattern.permute.xlu0 0
        %446 = vperm.xlu0 %445, %v443
        %v447 = vpop.permute.xlu0 %446
        %v449 = vadd.f32 %v442, %v447
        %v450 = vmax.f32 %v449, 0.0
        %v451 = vld [vmem:[%s4] sm:$0xf]
        %v452 = vpack.c.bf16 %v450, %v450
        %vm453 = vcmask 64512
        %v455 = vsel %vm453, %v451, 0
        %vm457 = vcmask 1043456
        %v459 = vsel %vm457, %v452, 0
        %461 = vmatpush.bf16.msra.mxu0 0
        %462 = vmatpush.bf16.msra.mxu0 0
        %463 = vmatpush.bf16.msra.mxu0 0
        %464 = vmatpush.bf16.msra.mxu0 0
        %465 = vmatpush.bf16.msra.mxu0 0
        %466 = vmatpush.bf16.msra.mxu0 0
        %467 = vmatpush.bf16.msra.mxu0 0
        %468 = vmatpush.bf16.msra.mxu0 %v459
        %469 = vmatmul.bf16.gmra.mxu0 %v455
        %v470 = vpop.f32.mrf.mxu0
        %v471 = vadd.f32 0.0, %v470
        %v472 = vpop.f32.mrf.mxu0
        %473 = vdwg.mxu0
        %v474 = vld [vmem:[%s5] sm:$0xff]
        %476 = vset.pattern.permute.xlu0 0
        %477 = vperm.xlu0 %476, %v474
        %v478 = vpop.permute.xlu0 %477
        %v480 = vmul.f32 %v471, %v478
        %v481 = vld [vmem:[%s6] sm:$0xff]
        %483 = vset.pattern.permute.xlu0 0
        %484 = vperm.xlu0 %483, %v481
        %v485 = vpop.permute.xlu0 %484
        %v487 = vadd.f32 %v480, %v485
        %v488 = vadd.f32 %v487, %v418
        %v489 = vmax.f32 %v488, 0.0
        %vm490 = vcmask 130048
        %491 = vst.msk [vmem:[%s372] sm:$0xff] %vm490, %v489
        %s492 = sand.u32 %s263, 1
        %s493 = scalar_lea.sflag [#allocation3], %s492
        %s494 = sand.u32 %s263, 1
        %s495 = smul.addr %s494, 8
        %s496 = scalar_lea.vmem [#allocation2], %s495
        // Predicated region
        $region61: #{residual_block_forward.5} parent=59 // pred_check
          %p497 = pneg %p273
        $region62: #{residual_block_forward.5} parent=59 // pred_check_branch
          %499 = sbr.rel (%p497) target = $region64
        $region63: #{residual_block_forward.5} parent=59 // pred_region
          %501 = vsyncadd %s493, 0
          %s502 = sadd.s32 %s29, %s28
          %s503 = smul.addr %s502, 8
          %s504 = scalar_lea.hbm %s10, %s503
          %s506 = sshll.u32 %s496, 4
          %s507 = int_to_ptr.vmem [resolvable:$true] %s506
          %s508 = sshll.u32 %s504, 4
          %s509 = int_to_ptr.hbm [resolvable:$true] %s508
          %511 = dma.vmem_to_hbm [thread:$0]  %s507, 128, %s509, %s493
        $region64: #{residual_block_forward.5} parent=59 // pred_fallthru
          _
      $region60: #{residual_block_forward.5} parent=5 // pred_fallthru
        _
      %p512 = scmp.le.s32.totalorder 2, %s19
      // Predicated region
      $region65: #{residual_block_forward.5} parent=5 // pred_check
        %p513 = pneg %p512
      $region66: #{residual_block_forward.5} parent=5 // pred_check_branch
        %515 = sbr.rel (%p513) target = $region68
      $region67: #{residual_block_forward.5} parent=5 // pred_region
        %s516 = ssub.s32 %s19, 2
        // Predicated region
        $region69: #{residual_block_forward.5} parent=67 // pred_check
          %p517 = pneg %p279
        $region70: #{residual_block_forward.5} parent=67 // pred_check_branch
          %519 = sbr.rel (%p517) target = $region72
        $region71: #{residual_block_forward.5} parent=67 // pred_region
          %s520 = sand.u32 %s264, 1
          %s521 = scalar_lea.sflag [#allocation3], %s520
          %s522 = sand.u32 %s264, 1
          %s523 = smul.addr %s522, 8
          %s524 = scalar_lea.vmem [#allocation2], %s523
          %526 = dma.done %s521, 128
        $region72: #{residual_block_forward.5} parent=67 // pred_fallthru
          _
      $region68: #{residual_block_forward.5} parent=5 // pred_fallthru
        _
    $region6: #{residual_block_forward.5} parent=1 // loop_footer
      %s23 = sadd.s32 1, %s19
    $region7: #{residual_block_forward.5} parent=1 // loop_footer_branch
      %18 = sbr.rel target = $region3
    $region8: #{residual_block_forward.5} parent=1 // loop_exit
      _
    %527 = vsyncpa [#allocation3], 1
    %s528 = scalar_lea.sflag [#allocation3], 1
    %529 = vsyncpa %s528, 1

</llo_original>
